<compile_context>
chip_gen: v5e
topology: v5e:2x2
jax: 0.10.0
libtpu: 0.0.40
codegen_flags: <defaults>
</compile_context>

<pallas_src>
import functools

import jax
import jax.numpy as jnp
from jax.experimental import pallas as pl
from jax.experimental.pallas import tpu as pltpu

LANE = 128


# ---------------------------------------------------------------------------
# Padding / layout helpers
# ---------------------------------------------------------------------------
def _round_up(n, m):
    return ((n + m - 1) // m) * m


def pad2d(a, rm=LANE, cm=LANE):
    r, c = a.shape
    return jnp.pad(a, ((0, _round_up(r, rm) - r), (0, _round_up(c, cm) - c)))


def pad_bias(b):
    n = b.shape[0]
    return jnp.pad(b, (0, _round_up(n, LANE) - n)).reshape(1, -1).astype(jnp.float32)


def shift_rows(w, shift):
    """Prepend `shift` zero rows so the weight skips leading input columns."""
    if shift == 0:
        return w
    return jnp.concatenate([jnp.zeros((shift, w.shape[1]), w.dtype), w], axis=0)


# ---------------------------------------------------------------------------
# Fused GCN layer kernel:  out = act( adj @ (x @ W) + b )   [+ optional MLP]
#   - XW computed once into VMEM scratch at grid step (0, 0), reused everywhere
#   - grid = (row tiles of adj, K tiles of adj); K is innermost (reduction)
#   - accumulation happens directly in the resident f32 output block
#   - if n_cls > 0, the classifier MLP is applied to the finished tile in the
#     epilogue and written as a second output (y)
# ---------------------------------------------------------------------------
def gcn_layer_kernel(*refs, relu_start, n_cls):
    n_in = 4 + 2 * n_cls
    x_ref, w_ref, b_ref, adj_ref = refs[0], refs[1], refs[2], refs[3]
    cls_refs = refs[4:n_in]
    out_refs = refs[n_in:-1]
    xw_ref = refs[-1]
    o_ref = out_refs[0]
    y_ref = out_refs[1] if n_cls > 0 else None

    i = pl.program_id(0)
    k = pl.program_id(1)
    nk = pl.num_programs(1)

    # Compute XW once for the whole grid (requires 'arbitrary' semantics).
    @pl.when(jnp.logical_and(i == 0, k == 0))
    def _():
        xw_ref[...] = jnp.dot(
            x_ref[...].astype(jnp.bfloat16), w_ref[...],
            preferred_element_type=jnp.float32).astype(xw_ref.dtype)

    @pl.when(k == 0)
    def _():
        o_ref[...] = jnp.zeros_like(o_ref)

    tk = adj_ref.shape[1]
    k_start = pl.multiple_of(k * tk, tk)
    o_ref[...] += jnp.dot(
        adj_ref[...], xw_ref[pl.ds(k_start, tk), :],
        preferred_element_type=jnp.float32)

    @pl.when(k == nk - 1)
    def _():
        acc = o_ref[...] + b_ref[...]
        if relu_start is not None:          # static Python config
            if relu_start <= 0:
                acc = jnp.maximum(acc, 0.0)
            else:
                # ReLU only on columns >= relu_start (estimator column stays linear)
                col = jax.lax.broadcasted_iota(jnp.int32, acc.shape, 1)
                acc = jnp.where(col < relu_start, acc, jnp.maximum(acc, 0.0))
        o_ref[...] = acc

        if n_cls > 0:
            # Classifier MLP applied to the tile while it is still resident.
            h = acc.astype(jnp.bfloat16)
            for li in range(n_cls):
                cw = cls_refs[2 * li][...]
                cb = cls_refs[2 * li + 1][...]
                h = jnp.dot(h, cw, preferred_element_type=jnp.float32) + cb
                if li < n_cls - 1:
                    h = jnp.maximum(h, 0.0).astype(jnp.bfloat16)
            y_ref[...] = h.astype(y_ref.dtype)


def gcn_layer(adj, x, w, b, *, relu_start, cls_wb=(), tm=128, tk=128):
    """adj: [Np, Np]; x: [Np, Fp]; w: [Fp, Hp]; b: [1, Hp].

    Returns (z,) or (z, y) as f32 arrays, all lane-dense (padded to 128).
    """
    Np, Fp = x.shape
    Hp = w.shape[1]
    assert adj.shape == (Np, Np)
    tm = min(tm, Np)
    tk = min(tk, Np)
    assert Np % tm == 0 and Np % tk == 0
    n_cls = len(cls_wb)

    in_specs = [
        pl.BlockSpec((Np, Fp), lambda i, k: (0, 0)),   # full x (loaded once)
        pl.BlockSpec((Fp, Hp), lambda i, k: (0, 0)),   # full W (loaded once)
        pl.BlockSpec((1, Hp), lambda i, k: (0, 0)),    # bias row
        pl.BlockSpec((tm, tk), lambda i, k: (i, k)),   # adj tile
    ]
    args = [x,
            w.astype(jnp.bfloat16),
            b.astype(jnp.float32),
            adj.astype(jnp.bfloat16)]
    for (cw, cb) in cls_wb:
        kin, kout = cw.shape
        in_specs.append(pl.BlockSpec((kin, kout), lambda i, k: (0, 0)))
        in_specs.append(pl.BlockSpec((1, kout), lambda i, k: (0, 0)))
        args.append(cw.astype(jnp.bfloat16))
        args.append(cb.astype(jnp.float32))

    out_shapes = [jax.ShapeDtypeStruct((Np, Hp), jnp.float32)]
    out_specs = [pl.BlockSpec((tm, Hp), lambda i, k: (i, 0))]
    if n_cls > 0:
        Hy = cls_wb[-1][0].shape[1]
        out_shapes.append(jax.ShapeDtypeStruct((Np, Hy), jnp.float32))
        out_specs.append(pl.BlockSpec((tm, Hy), lambda i, k: (i, 0)))

    kernel = functools.partial(gcn_layer_kernel, relu_start=relu_start, n_cls=n_cls)
    return pl.pallas_call(
        kernel,
        out_shape=tuple(out_shapes),
        grid_spec=pltpu.PrefetchScalarGridSpec(
            num_scalar_prefetch=0,
            grid=(Np // tm, Np // tk),
            in_specs=in_specs,
            out_specs=tuple(out_specs),
            scratch_shapes=[pltpu.VMEM((Np, Hp), jnp.bfloat16)],  # XW scratch
        ),
        # 'arbitrary' required: the (i==0, k==0) XW-scratch trick assumes a
        # sequential grid (megacore sharding would break the assumption).
        compiler_params=pltpu.CompilerParams(
            dimension_semantics=("arbitrary", "arbitrary")),
    )(*args)


# ---------------------------------------------------------------------------
# Parameter construction (deterministic, Glorot-style) and fusion/padding prep
# ---------------------------------------------------------------------------
def glorot(key, fan_in, fan_out):
    lim = jnp.sqrt(6.0 / (fan_in + fan_out))
    return jax.random.uniform(key, (fan_in, fan_out), jnp.float32, -lim, lim)


def make_linear_params(key, dims):
    params = []
    for i in range(len(dims) - 1):
        key, wk = jax.random.split(key)
        params.append((glorot(wk, dims[i], dims[i + 1]),
                       jnp.zeros((dims[i + 1],), jnp.float32)))
    return params, key


def prepare_fairgnn_params(est_params, gnn_params, cls_params):
    """Fuse estimator + first GNN layer, shift the consumer of the fused
    output by one column, and zero-pad everything to 128 lanes."""
    (w_e, b_e) = est_params[0]          # [F, 1], [1]
    (w_g1, b_g1) = gnn_params[0]        # [F, H1], [H1]
    n_gnn = len(gnn_params)

    # Fused first adjacency pass: col 0 = estimator (linear), cols 1.. = GNN layer 1.
    w_f = jnp.concatenate([w_e, w_g1], axis=1)
    b_f = jnp.concatenate([b_e, b_g1], axis=0)
    fused_wb = (pad2d(w_f), pad_bias(b_f))

    # Remaining GNN layers; layer 2 consumes the fused layout -> shift rows by 1.
    gnn_rest_wb = []
    for li in range(1, n_gnn):
        w, b = gnn_params[li]
        w = shift_rows(w, 1 if li == 1 else 0)
        gnn_rest_wb.append((pad2d(w), pad_bias(b)))

    # Classifier; if the GNN had only the fused layer, its first weight consumes
    # the fused layout (z starts at column 1) -> shift rows by 1.
    z_shift = 1 if n_gnn == 1 else 0
    cls_wb = []
    for li, (w, b) in enumerate(cls_params):
        w = shift_rows(w, z_shift if li == 0 else 0)
        cls_wb.append((pad2d(w), pad_bias(b)))

    return fused_wb, gnn_rest_wb, cls_wb


# ---------------------------------------------------------------------------
# FairGNN_ALL forward: s = estimator(x, g); z = GNN(x, g); y = classifier(z)
# ---------------------------------------------------------------------------
def fairgnn_all_forward(adj_p, x_p, fused_wb, gnn_rest_wb, cls_wb,
                        *, n_nodes, num_hidden):
    n_rest = len(gnn_rest_wb)
    w_f, b_f = fused_wb

    if n_rest == 0:
        # Single kernel: estimator + only GNN layer + classifier, all fused.
        h, y_full = gcn_layer(adj_p, x_p, w_f, b_f, relu_start=None, cls_wb=cls_wb)
        s_full = h
        z_off = 1
    else:
        # Fused estimator + GNN layer 1: ReLU on GNN cols only (col 0 = s, linear).
        (h,) = gcn_layer(adj_p, x_p, w_f, b_f, relu_start=1)
        s_full = h
        # Remaining GNN layers: ReLU between, linear last; classifier fused
        # into the last layer's epilogue.
        y_full = None
        for li, (w, b) in enumerate(gnn_rest_wb):
            is_last = (li == n_rest - 1)
            if is_last:
                h, y_full = gcn_layer(adj_p, h, w, b, relu_start=None, cls_wb=cls_wb)
            else:
                (h,) = gcn_layer(adj_p, h, w, b, relu_start=0)
        z_off = 0

    s = s_full[:n_nodes, 0:1]
    z = h[:n_nodes, z_off:z_off + num_hidden]
    y = y_full[:n_nodes, 0:1]
    return s, z, y


# ---------------------------------------------------------------------------
# Pure-JAX f32 reference (for correctness check)
# ---------------------------------------------------------------------------
def reference_forward(adj, x, est_params, gnn_params, cls_params):
    def gcn_stack(h, params):
        n = len(params)
        for li, (w, b) in enumerate(params):
            h = adj @ (h @ w) + b
            if li < n - 1:
                h = jnp.maximum(h, 0.0)
        return h

    s = gcn_stack(x, est_params)
    z = gcn_stack(x, gnn_params)
    h = z
    n = len(cls_params)
    for li, (w, b) in enumerate(cls_params):
        h = h @ w + b
        if li < n - 1:
            h = jnp.maximum(h, 0.0)
    return s, z, h


if __name__ == "__main__":
    # Model hyper-params (small, consistent with the module's __init__).
    N_NODES = 128
    NFEAT = 32
    NUM_HIDDEN = 32
    GNN_LAYER_SIZE = 2
    GNN_HIDDEN = 32
    CLS_LAYER_SIZE = 2

    key = jax.random.PRNGKey(0)

    # Inputs: random features + row-normalized adjacency with self-loops.
    key, kx, ka = jax.random.split(key, 3)
    x = jax.random.normal(kx, (N_NODES, NFEAT), jnp.float32)
    edge_logits = jax.random.uniform(ka, (N_NODES, N_NODES), jnp.float32)
    adj_bin = (edge_logits > 0.9).astype(jnp.float32)
    adj_bin = jnp.maximum(adj_bin, adj_bin.T) + jnp.eye(N_NODES, dtype=jnp.float32)
    deg = jnp.sum(adj_bin, axis=1, keepdims=True)
    adj = adj_bin / deg                                    # row-normalized

    # Parameters.
    est_params, key = make_linear_params(key, [NFEAT, 1])
    gnn_dims = [NFEAT] + [GNN_HIDDEN] * (GNN_LAYER_SIZE - 1) + [NUM_HIDDEN]
    gnn_params, key = make_linear_params(key, gnn_dims)
    cls_dims = [NUM_HIDDEN] + [NUM_HIDDEN] * (CLS_LAYER_SIZE - 1) + [1]
    cls_params, key = make_linear_params(key, cls_dims)

    # Fuse / pad parameters and inputs once (zero-padded lanes stay exactly
    # zero through every layer, so slicing at the end is exact).
    fused_wb, gnn_rest_wb, cls_wb = prepare_fairgnn_params(
        est_params, gnn_params, cls_params)
    adj_p = pad2d(adj).astype(jnp.bfloat16)      # [Np, Np] bf16
    x_p = pad2d(x).astype(jnp.bfloat16)          # [Np, Fp] bf16

    fwd = jax.jit(functools.partial(
        fairgnn_all_forward, n_nodes=N_NODES, num_hidden=NUM_HIDDEN))
    s, z, y = fwd(adj_p, x_p, fused_wb, gnn_rest_wb, cls_wb)
    jax.block_until_ready((s, z, y))

    # Shape / finiteness / numerical checks against an f32 reference
    # (bf16 matmuls -> loose tolerance).
    s_ref, z_ref, y_ref = reference_forward(adj, x, est_params, gnn_params, cls_params)
    assert s.shape == (N_NODES, 1)
    assert z.shape == (N_NODES, NUM_HIDDEN)
    assert y.shape == (N_NODES, 1)
    for got, ref in ((s, s_ref), (z, z_ref), (y, y_ref)):
        assert bool(jnp.all(jnp.isfinite(got)))
        assert bool(jnp.allclose(got, ref, atol=1e-1, rtol=1e-1)), \
            float(jnp.max(jnp.abs(got - ref)))

    print("KERNEL_OK")
</pallas_src>

<mosaic_0001>
module attributes {stable_mosaic.version = 11 : i64} {
  func.func @gcn_layer_kernel(%arg0: i32, %arg1: i32, %arg2: memref<128x128xbf16, #tpu.memory_space<vmem>>, %arg3: memref<128x128xbf16, #tpu.memory_space<vmem>>, %arg4: memref<1x128xf32, #tpu.memory_space<vmem>>, %arg5: memref<128x128xbf16, #tpu.memory_space<vmem>>, %arg6: memref<128x128xf32, #tpu.memory_space<vmem>>, %arg7: memref<128x128xbf16, #tpu.memory_space<vmem>>) attributes {dimension_semantics = [#tpu.dimension_semantics<arbitrary>, #tpu.dimension_semantics<arbitrary>], iteration_bounds = array<i64: 1, 1>, scalar_prefetch = 0 : i64, scratch_operands = 1 : i64, tpu.core_type = #tpu.core_type<tc>, window_params = [{pipeline_mode = #tpu.pipeline_mode<synchronous>, transform_indices = @transform_0, window_bounds = array<i64: 128, 128>}, {pipeline_mode = #tpu.pipeline_mode<synchronous>, transform_indices = @transform_1, window_bounds = array<i64: 128, 128>}, {pipeline_mode = #tpu.pipeline_mode<synchronous>, transform_indices = @transform_2, window_bounds = array<i64: 1, 128>}, {transform_indices = @transform_3, window_bounds = array<i64: 128, 128>}, {transform_indices = @transform_4, window_bounds = array<i64: 128, 128>}]} {
    %c0_i32 = arith.constant 0 : i32
    %0 = arith.cmpi eq, %arg0, %c0_i32 : i32
    %c0_i32_0 = arith.constant 0 : i32
    %1 = arith.cmpi eq, %arg1, %c0_i32_0 : i32
    %2 = arith.andi %0, %1 : i1
    %3 = arith.extui %2 : i1 to i32
    %c0_i32_1 = arith.constant 0 : i32
    %4 = arith.cmpi ne, %3, %c0_i32_1 : i32
    scf.if %4 {
      %c0_12 = arith.constant 0 : index
      %c0_13 = arith.constant 0 : index
      %20 = vector.load %arg2[%c0_12, %c0_13] : memref<128x128xbf16, #tpu.memory_space<vmem>>, vector<128x128xbf16>
      %c0_14 = arith.constant 0 : index
      %c0_15 = arith.constant 0 : index
      %21 = vector.load %arg3[%c0_14, %c0_15] : memref<128x128xbf16, #tpu.memory_space<vmem>>, vector<128x128xbf16>
      %cst_16 = arith.constant dense<0.000000e+00> : vector<128x128xf32>
      %22 = tpu.matmul %20, %21, %cst_16 {dimension_numbers = #tpu.dot_dimension_numbers<[1], [0], [0], [1], [0, 0, 1, 1], [], []>} : vector<128x128xbf16>, vector<128x128xbf16>, vector<128x128xf32> -> vector<128x128xf32>
      %23 = arith.truncf %22 : vector<128x128xf32> to vector<128x128xbf16>
      %c0_17 = arith.constant 0 : index
      %c0_18 = arith.constant 0 : index
      %24 = vector.load %arg7[%c0_17, %c0_18] : memref<128x128xbf16, #tpu.memory_space<vmem>>, vector<128x128xbf16>
      tpu.vector_store %arg7[%c0_17, %c0_18], %23 {strides = array<i32>} : memref<128x128xbf16, #tpu.memory_space<vmem>>, vector<128x128xbf16>,
    } else {
    }
    %c0_i32_2 = arith.constant 0 : i32
    %5 = arith.cmpi eq, %arg1, %c0_i32_2 : i32
    %6 = arith.extui %5 : i1 to i32
    %c0_i32_3 = arith.constant 0 : i32
    %7 = arith.cmpi ne, %6, %c0_i32_3 : i32
    scf.if %7 {
      %cst_12 = arith.constant 0.000000e+00 : f32
      %20 = vector.broadcast %cst_12 : f32 to vector<128x128xf32>
      %c0_13 = arith.constant 0 : index
      %c0_14 = arith.constant 0 : index
      %21 = vector.load %arg6[%c0_13, %c0_14] : memref<128x128xf32, #tpu.memory_space<vmem>>, vector<128x128xf32>
      tpu.vector_store %arg6[%c0_13, %c0_14], %20 {strides = array<i32>} : memref<128x128xf32, #tpu.memory_space<vmem>>, vector<128x128xf32>,
    } else {
    }
    %c128_i32 = arith.constant 128 : i32
    %8 = arith.muli %arg1, %c128_i32 : i32
    %9 = tpu.assume_multiple %8, 128 : i32
    %c0 = arith.constant 0 : index
    %c0_4 = arith.constant 0 : index
    %10 = vector.load %arg6[%c0, %c0_4] : memref<128x128xf32, #tpu.memory_space<vmem>>, vector<128x128xf32>
    %c0_5 = arith.constant 0 : index
    %c0_6 = arith.constant 0 : index
    %11 = vector.load %arg5[%c0_5, %c0_6] : memref<128x128xbf16, #tpu.memory_space<vmem>>, vector<128x128xbf16>
    %12 = arith.index_cast %9 : i32 to index
    %c0_7 = arith.constant 0 : index
    %13 = vector.load %arg7[%12, %c0_7] : memref<128x128xbf16, #tpu.memory_space<vmem>>, vector<128x128xbf16>
    %cst = arith.constant dense<0.000000e+00> : vector<128x128xf32>
    %14 = tpu.matmul %11, %13, %cst {dimension_numbers = #tpu.dot_dimension_numbers<[1], [0], [0], [1], [0, 0, 1, 1], [], []>} : vector<128x128xbf16>, vector<128x128xbf16>, vector<128x128xf32> -> vector<128x128xf32>
    %15 = arith.addf %10, %14 : vector<128x128xf32>
    %c0_8 = arith.constant 0 : index
    %c0_9 = arith.constant 0 : index
    %16 = vector.load %arg6[%c0_8, %c0_9] : memref<128x128xf32, #tpu.memory_space<vmem>>, vector<128x128xf32>
    tpu.vector_store %arg6[%c0_8, %c0_9], %15 {strides = array<i32>} : memref<128x128xf32, #tpu.memory_space<vmem>>, vector<128x128xf32>,
    %c0_i32_10 = arith.constant 0 : i32
    %17 = arith.cmpi eq, %arg1, %c0_i32_10 : i32
    %18 = arith.extui %17 : i1 to i32
    %c0_i32_11 = arith.constant 0 : i32
    %19 = arith.cmpi ne, %18, %c0_i32_11 : i32
    scf.if %19 {
      %c0_12 = arith.constant 0 : index
      %c0_13 = arith.constant 0 : index
      %20 = vector.load %arg6[%c0_12, %c0_13] : memref<128x128xf32, #tpu.memory_space<vmem>>, vector<128x128xf32>
      %c0_14 = arith.constant 0 : index
      %c0_15 = arith.constant 0 : index
      %21 = vector.load %arg4[%c0_14, %c0_15] : memref<1x128xf32, #tpu.memory_space<vmem>>, vector<1x128xf32>
      %22 = vector.broadcast %21 : vector<1x128xf32> to vector<128x128xf32>
      %23 = arith.addf %20, %22 : vector<128x128xf32>
      %24 = tpu.iota {dimensions = array<i32: 1>} : vector<128x128xi32>
      %c1_i32 = arith.constant 1 : i32
      %25 = vector.broadcast %c1_i32 : i32 to vector<128x128xi32>
      %26 = arith.cmpi slt, %24, %25 : vector<128x128xi32>
      %cst_16 = arith.constant 0.000000e+00 : f32
      %27 = vector.broadcast %cst_16 : f32 to vector<128x128xf32>
      %28 = arith.maximumf %23, %27 : vector<128x128xf32>
      %29 = arith.select %26, %23, %28 : vector<128x128xi1>, vector<128x128xf32>
      %c0_17 = arith.constant 0 : index
      %c0_18 = arith.constant 0 : index
      %30 = vector.load %arg6[%c0_17, %c0_18] : memref<128x128xf32, #tpu.memory_space<vmem>>, vector<128x128xf32>
      tpu.vector_store %arg6[%c0_17, %c0_18], %29 {strides = array<i32>} : memref<128x128xf32, #tpu.memory_space<vmem>>, vector<128x128xf32>,
    } else {
    }
    return
  }
  func.func @transform_0(%arg0: i32, %arg1: i32) -> (i32, i32) {
    %c0_i32 = arith.constant 0 : i32
    %c0_i32_0 = arith.constant 0 : i32
    %c0_i32_1 = arith.constant 0 : i32
    return %c0_i32, %c0_i32_0 : i32, i32
  }
  func.func @transform_1(%arg0: i32, %arg1: i32) -> (i32, i32) {
    %c0_i32 = arith.constant 0 : i32
    %c0_i32_0 = arith.constant 0 : i32
    %c0_i32_1 = arith.constant 0 : i32
    return %c0_i32, %c0_i32_0 : i32, i32
  }
  func.func @transform_2(%arg0: i32, %arg1: i32) -> (i32, i32) {
    %c0_i32 = arith.constant 0 : i32
    %c0_i32_0 = arith.constant 0 : i32
    %c0_i32_1 = arith.constant 0 : i32
    return %c0_i32, %c0_i32_0 : i32, i32
  }
  func.func @transform_3(%arg0: i32, %arg1: i32) -> (i32, i32) {
    %c0_i32 = arith.constant 0 : i32
    return %arg0, %arg1 : i32, i32
  }
  func.func @transform_4(%arg0: i32, %arg1: i32) -> (i32, i32) {
    %c0_i32 = arith.constant 0 : i32
    %c0_i32_0 = arith.constant 0 : i32
    return %arg0, %c0_i32 : i32, i32
  }
}

module attributes {stable_mosaic.version = 11 : i64} {
  func.func @gcn_layer_kernel(%arg0: i32, %arg1: i32, %arg2: memref<128x128xf32, #tpu.memory_space<vmem>>, %arg3: memref<128x128xbf16, #tpu.memory_space<vmem>>, %arg4: memref<1x128xf32, #tpu.memory_space<vmem>>, %arg5: memref<128x128xbf16, #tpu.memory_space<vmem>>, %arg6: memref<128x128xbf16, #tpu.memory_space<vmem>>, %arg7: memref<1x128xf32, #tpu.memory_space<vmem>>, %arg8: memref<128x128xbf16, #tpu.memory_space<vmem>>, %arg9: memref<1x128xf32, #tpu.memory_space<vmem>>, %arg10: memref<128x128xf32, #tpu.memory_space<vmem>>, %arg11: memref<128x128xf32, #tpu.memory_space<vmem>>, %arg12: memref<128x128xbf16, #tpu.memory_space<vmem>>) attributes {dimension_semantics = [#tpu.dimension_semantics<arbitrary>, #tpu.dimension_semantics<arbitrary>], iteration_bounds = array<i64: 1, 1>, scalar_prefetch = 0 : i64, scratch_operands = 1 : i64, tpu.core_type = #tpu.core_type<tc>, window_params = [{pipeline_mode = #tpu.pipeline_mode<synchronous>, transform_indices = @transform_0, window_bounds = array<i64: 128, 128>}, {pipeline_mode = #tpu.pipeline_mode<synchronous>, transform_indices = @transform_1, window_bounds = array<i64: 128, 128>}, {pipeline_mode = #tpu.pipeline_mode<synchronous>, transform_indices = @transform_2, window_bounds = array<i64: 1, 128>}, {transform_indices = @transform_3, window_bounds = array<i64: 128, 128>}, {pipeline_mode = #tpu.pipeline_mode<synchronous>, transform_indices = @transform_4, window_bounds = array<i64: 128, 128>}, {pipeline_mode = #tpu.pipeline_mode<synchronous>, transform_indices = @transform_5, window_bounds = array<i64: 1, 128>}, {pipeline_mode = #tpu.pipeline_mode<synchronous>, transform_indices = @transform_6, window_bounds = array<i64: 128, 128>}, {pipeline_mode = #tpu.pipeline_mode<synchronous>, transform_indices = @transform_7, window_bounds = array<i64: 1, 128>}, {transform_indices = @transform_8, window_bounds = array<i64: 128, 128>}, {transform_indices = @transform_9, window_bounds = array<i64: 128, 128>}]} {
    %c0_i32 = arith.constant 0 : i32
    %0 = arith.cmpi eq, %arg0, %c0_i32 : i32
    %c0_i32_0 = arith.constant 0 : i32
    %1 = arith.cmpi eq, %arg1, %c0_i32_0 : i32
    %2 = arith.andi %0, %1 : i1
    %3 = arith.extui %2 : i1 to i32
    %c0_i32_1 = arith.constant 0 : i32
    %4 = arith.cmpi ne, %3, %c0_i32_1 : i32
    scf.if %4 {
      %c0_12 = arith.constant 0 : index
      %c0_13 = arith.constant 0 : index
      %20 = vector.load %arg2[%c0_12, %c0_13] : memref<128x128xf32, #tpu.memory_space<vmem>>, vector<128x128xf32>
      %21 = arith.truncf %20 : vector<128x128xf32> to vector<128x128xbf16>
      %c0_14 = arith.constant 0 : index
      %c0_15 = arith.constant 0 : index
      %22 = vector.load %arg3[%c0_14, %c0_15] : memref<128x128xbf16, #tpu.memory_space<vmem>>, vector<128x128xbf16>
      %cst_16 = arith.constant dense<0.000000e+00> : vector<128x128xf32>
      %23 = tpu.matmul %21, %22, %cst_16 {dimension_numbers = #tpu.dot_dimension_numbers<[1], [0], [0], [1], [0, 0, 1, 1], [], []>} : vector<128x128xbf16>, vector<128x128xbf16>, vector<128x128xf32> -> vector<128x128xf32>
      %24 = arith.truncf %23 : vector<128x128xf32> to vector<128x128xbf16>
      %c0_17 = arith.constant 0 : index
      %c0_18 = arith.constant 0 : index
      %25 = vector.load %arg12[%c0_17, %c0_18] : memref<128x128xbf16, #tpu.memory_space<vmem>>, vector<128x128xbf16>
      tpu.vector_store %arg12[%c0_17, %c0_18], %24 {strides = array<i32>} : memref<128x128xbf16, #tpu.memory_space<vmem>>, vector<128x128xbf16>,
    } else {
    }
    %c0_i32_2 = arith.constant 0 : i32
    %5 = arith.cmpi eq, %arg1, %c0_i32_2 : i32
    %6 = arith.extui %5 : i1 to i32
    %c0_i32_3 = arith.constant 0 : i32
    %7 = arith.cmpi ne, %6, %c0_i32_3 : i32
    scf.if %7 {
      %cst_12 = arith.constant 0.000000e+00 : f32
      %20 = vector.broadcast %cst_12 : f32 to vector<128x128xf32>
      %c0_13 = arith.constant 0 : index
      %c0_14 = arith.constant 0 : index
      %21 = vector.load %arg10[%c0_13, %c0_14] : memref<128x128xf32, #tpu.memory_space<vmem>>, vector<128x128xf32>
      tpu.vector_store %arg10[%c0_13, %c0_14], %20 {strides = array<i32>} : memref<128x128xf32, #tpu.memory_space<vmem>>, vector<128x128xf32>,
    } else {
    }
    %c128_i32 = arith.constant 128 : i32
    %8 = arith.muli %arg1, %c128_i32 : i32
    %9 = tpu.assume_multiple %8, 128 : i32
    %c0 = arith.constant 0 : index
    %c0_4 = arith.constant 0 : index
    %10 = vector.load %arg10[%c0, %c0_4] : memref<128x128xf32, #tpu.memory_space<vmem>>, vector<128x128xf32>
    %c0_5 = arith.constant 0 : index
    %c0_6 = arith.constant 0 : index
    %11 = vector.load %arg5[%c0_5, %c0_6] : memref<128x128xbf16, #tpu.memory_space<vmem>>, vector<128x128xbf16>
    %12 = arith.index_cast %9 : i32 to index
    %c0_7 = arith.constant 0 : index
    %13 = vector.load %arg12[%12, %c0_7] : memref<128x128xbf16, #tpu.memory_space<vmem>>, vector<128x128xbf16>
    %cst = arith.constant dense<0.000000e+00> : vector<128x128xf32>
    %14 = tpu.matmul %11, %13, %cst {dimension_numbers = #tpu.dot_dimension_numbers<[1], [0], [0], [1], [0, 0, 1, 1], [], []>} : vector<128x128xbf16>, vector<128x128xbf16>, vector<128x128xf32> -> vector<128x128xf32>
    %15 = arith.addf %10, %14 : vector<128x128xf32>
    %c0_8 = arith.constant 0 : index
    %c0_9 = arith.constant 0 : index
    %16 = vector.load %arg10[%c0_8, %c0_9] : memref<128x128xf32, #tpu.memory_space<vmem>>, vector<128x128xf32>
    tpu.vector_store %arg10[%c0_8, %c0_9], %15 {strides = array<i32>} : memref<128x128xf32, #tpu.memory_space<vmem>>, vector<128x128xf32>,
    %c0_i32_10 = arith.constant 0 : i32
    %17 = arith.cmpi eq, %arg1, %c0_i32_10 : i32
    %18 = arith.extui %17 : i1 to i32
    %c0_i32_11 = arith.constant 0 : i32
    %19 = arith.cmpi ne, %18, %c0_i32_11 : i32
    scf.if %19 {
      %c0_12 = arith.constant 0 : index
      %c0_13 = arith.constant 0 : index
      %20 = vector.load %arg10[%c0_12, %c0_13] : memref<128x128xf32, #tpu.memory_space<vmem>>, vector<128x128xf32>
      %c0_14 = arith.constant 0 : index
      %c0_15 = arith.constant 0 : index
      %21 = vector.load %arg4[%c0_14, %c0_15] : memref<1x128xf32, #tpu.memory_space<vmem>>, vector<1x128xf32>
      %22 = vector.broadcast %21 : vector<1x128xf32> to vector<128x128xf32>
      %23 = arith.addf %20, %22 : vector<128x128xf32>
      %c0_16 = arith.constant 0 : index
      %c0_17 = arith.constant 0 : index
      %24 = vector.load %arg10[%c0_16, %c0_17] : memref<128x128xf32, #tpu.memory_space<vmem>>, vector<128x128xf32>
      tpu.vector_store %arg10[%c0_16, %c0_17], %23 {strides = array<i32>} : memref<128x128xf32, #tpu.memory_space<vmem>>, vector<128x128xf32>,
      %25 = arith.truncf %23 : vector<128x128xf32> to vector<128x128xbf16>
      %c0_18 = arith.constant 0 : index
      %c0_19 = arith.constant 0 : index
      %26 = vector.load %arg6[%c0_18, %c0_19] : memref<128x128xbf16, #tpu.memory_space<vmem>>, vector<128x128xbf16>
      %c0_20 = arith.constant 0 : index
      %c0_21 = arith.constant 0 : index
      %27 = vector.load %arg7[%c0_20, %c0_21] : memref<1x128xf32, #tpu.memory_space<vmem>>, vector<1x128xf32>
      %cst_22 = arith.constant dense<0.000000e+00> : vector<128x128xf32>
      %28 = tpu.matmul %25, %26, %cst_22 {dimension_numbers = #tpu.dot_dimension_numbers<[1], [0], [0], [1], [0, 0, 1, 1], [], []>} : vector<128x128xbf16>, vector<128x128xbf16>, vector<128x128xf32> -> vector<128x128xf32>
      %29 = vector.broadcast %27 : vector<1x128xf32> to vector<128x128xf32>
      %30 = arith.addf %28, %29 : vector<128x128xf32>
      %cst_23 = arith.constant 0.000000e+00 : f32
      %31 = vector.broadcast %cst_23 : f32 to vector<128x128xf32>
      %32 = arith.maximumf %30, %31 : vector<128x128xf32>
      %33 = arith.truncf %32 : vector<128x128xf32> to vector<128x128xbf16>
      %c0_24 = arith.constant 0 : index
      %c0_25 = arith.constant 0 : index
      %34 = vector.load %arg8[%c0_24, %c0_25] : memref<128x128xbf16, #tpu.memory_space<vmem>>, vector<128x128xbf16>
      %c0_26 = arith.constant 0 : index
      %c0_27 = arith.constant 0 : index
      %35 = vector.load %arg9[%c0_26, %c0_27] : memref<1x128xf32, #tpu.memory_space<vmem>>, vector<1x128xf32>
      %cst_28 = arith.constant dense<0.000000e+00> : vector<128x128xf32>
      %36 = tpu.matmul %33, %34, %cst_28 {dimension_numbers = #tpu.dot_dimension_numbers<[1], [0], [0], [1], [0, 0, 1, 1], [], []>} : vector<128x128xbf16>, vector<128x128xbf16>, vector<128x128xf32> -> vector<128x128xf32>
      %37 = vector.broadcast %35 : vector<1x128xf32> to vector<128x128xf32>
      %38 = arith.addf %36, %37 : vector<128x128xf32>
      %c0_29 = arith.constant 0 : index
      %c0_30 = arith.constant 0 : index
      %39 = vector.load %arg11[%c0_29, %c0_30] : memref<128x128xf32, #tpu.memory_space<vmem>>, vector<128x128xf32>
      tpu.vector_store %arg11[%c0_29, %c0_30], %38 {strides = array<i32>} : memref<128x128xf32, #tpu.memory_space<vmem>>, vector<128x128xf32>,
    } else {
    }
    return
  }
  func.func @transform_0(%arg0: i32, %arg1: i32) -> (i32, i32) {
    %c0_i32 = arith.constant 0 : i32
    %c0_i32_0 = arith.constant 0 : i32
    %c0_i32_1 = arith.constant 0 : i32
    return %c0_i32, %c0_i32_0 : i32, i32
  }
  func.func @transform_1(%arg0: i32, %arg1: i32) -> (i32, i32) {
    %c0_i32 = arith.constant 0 : i32
    %c0_i32_0 = arith.constant 0 : i32
    %c0_i32_1 = arith.constant 0 : i32
    return %c0_i32, %c0_i32_0 : i32, i32
  }
  func.func @transform_2(%arg0: i32, %arg1: i32) -> (i32, i32) {
    %c0_i32 = arith.constant 0 : i32
    %c0_i32_0 = arith.constant 0 : i32
    %c0_i32_1 = arith.constant 0 : i32
    return %c0_i32, %c0_i32_0 : i32, i32
  }
  func.func @transform_3(%arg0: i32, %arg1: i32) -> (i32, i32) {
    %c0_i32 = arith.constant 0 : i32
    return %arg0, %arg1 : i32, i32
  }
  func.func @transform_4(%arg0: i32, %arg1: i32) -> (i32, i32) {
    %c0_i32 = arith.constant 0 : i32
    %c0_i32_0 = arith.constant 0 : i32
    %c0_i32_1 = arith.constant 0 : i32
    return %c0_i32, %c0_i32_0 : i32, i32
  }
  func.func @transform_5(%arg0: i32, %arg1: i32) -> (i32, i32) {
    %c0_i32 = arith.constant 0 : i32
    %c0_i32_0 = arith.constant 0 : i32
    %c0_i32_1 = arith.constant 0 : i32
    return %c0_i32, %c0_i32_0 : i32, i32
  }
  func.func @transform_6(%arg0: i32, %arg1: i32) -> (i32, i32) {
    %c0_i32 = arith.constant 0 : i32
    %c0_i32_0 = arith.constant 0 : i32
    %c0_i32_1 = arith.constant 0 : i32
    return %c0_i32, %c0_i32_0 : i32, i32
  }
  func.func @transform_7(%arg0: i32, %arg1: i32) -> (i32, i32) {
    %c0_i32 = arith.constant 0 : i32
    %c0_i32_0 = arith.constant 0 : i32
    %c0_i32_1 = arith.constant 0 : i32
    return %c0_i32, %c0_i32_0 : i32, i32
  }
  func.func @transform_8(%arg0: i32, %arg1: i32) -> (i32, i32) {
    %c0_i32 = arith.constant 0 : i32
    %c0_i32_0 = arith.constant 0 : i32
    return %arg0, %c0_i32 : i32, i32
  }
  func.func @transform_9(%arg0: i32, %arg1: i32) -> (i32, i32) {
    %c0_i32 = arith.constant 0 : i32
    %c0_i32_0 = arith.constant 0 : i32
    return %arg0, %c0_i32 : i32, i32
  }
}

</mosaic_0001>

<llo_original>
// kernel: fairgnn_all_forward.2
$region0: #{fairgnn_all_forward.2}
  #allocation0 [shape = 'u32[]', space=smem, size = 0x4, offset = 0x4, fixed_abs, tag = 'smem constant byte address 0x4 - core index']
  #allocation1 [shape = 'u32[72,128]{1,0:T(1,128)}', space=vmem, size = 0x9000, scoped, tag = 'internal scratch']
  #allocation2 [shape = 'bf16[128,128]{1,0:T(8,128)(2,1)}', space=vmem, size = 0x8000, scoped, tag = 'scratch operand']
  %s0 = inlined_call_operand.vmem [shape: bf16[128,128], index: 0, kind: input, shape index: {}]
  %s1 = inlined_call_operand.vmem [shape: bf16[128,128], index: 1, kind: input, shape index: {}]
  %s2 = inlined_call_operand.vmem [shape: f32[1,128], index: 2, kind: input, shape index: {}]
  %s3 = inlined_call_operand.hbm [shape: bf16[128,128], index: 3, kind: input, shape index: {}]
  %s4 = inlined_call_operand.vmem [shape: f32[128,128], index: 4, kind: output, shape index: {}]
  %s5 = sld [smem:[#allocation0]]
  $region42: #{fairgnn_all_forward.2} parent=0
    _
  %s7 = ssub.s32 1, %s5
  %s8 = scalar_select 0, %s7, %s5
  $region1: #{fairgnn_all_forward.2} parent=0
    #allocation3 [shape = 'u8[32768]{0}', space=vmem, size = 0x8000, scoped, tag = 'input window, operand 3, single buffered']
    #allocation4 [shape = 's32[1]{0}', space=sflag, size = 0x4, scoped, tag = 'scoped memory for fairgnn_all_forward.2']
    %9 = vsyncpa [#allocation4], 0
    // Predicated region
    $region2: #{fairgnn_all_forward.2} parent=1 // pred_check
      _
    $region3: #{fairgnn_all_forward.2} parent=1 // pred_check_branch
      %11 = sbr.rel (0) target = $region5
    $region4: #{fairgnn_all_forward.2} parent=1 // pred_region
      _
    $region5: #{fairgnn_all_forward.2} parent=1 // pred_fallthru
      _
    // Predicated region
    $region6: #{fairgnn_all_forward.2} parent=1 // pred_check
      _
    $region7: #{fairgnn_all_forward.2} parent=1 // pred_check_branch
      %13 = sbr.rel (0) target = $region9
    $region8: #{fairgnn_all_forward.2} parent=1 // pred_region
      _
    $region9: #{fairgnn_all_forward.2} parent=1 // pred_fallthru
      _
    // Predicated region
    $region10: #{fairgnn_all_forward.2} parent=1 // pred_check
      _
    $region11: #{fairgnn_all_forward.2} parent=1 // pred_check_branch
      %15 = sbr.rel (0) target = $region13
    $region12: #{fairgnn_all_forward.2} parent=1 // pred_region
      _
    $region13: #{fairgnn_all_forward.2} parent=1 // pred_fallthru
      _
    // Predicated region
    $region14: #{fairgnn_all_forward.2} parent=1 // pred_check
      _
    $region15: #{fairgnn_all_forward.2} parent=1 // pred_check_branch
      %17 = sbr.rel (0) target = $region17
    $region16: #{fairgnn_all_forward.2} parent=1 // pred_region
      %19 = vsyncadd [#allocation4], 0
      %s20 = sshll.u32 %s3, 4
      %s21 = int_to_ptr.hbm [resolvable:$true] %s20
      %s22 = sshll.u32 [#allocation3], 4
      %s23 = int_to_ptr.vmem [resolvable:$true] %s22
      %28 = dma.hbm_to_vmem [thread:$0]  %s21, 1024, %s23, [#allocation4], 64, 64, 4
    $region17: #{fairgnn_all_forward.2} parent=1 // pred_fallthru
      _
    // Predicated region
    $region18: #{fairgnn_all_forward.2} parent=1 // pred_check
      _
    $region19: #{fairgnn_all_forward.2} parent=1 // pred_check_branch
      %30 = sbr.rel (0) target = $region21
    $region20: #{fairgnn_all_forward.2} parent=1 // pred_region
      %32 = dma.done [#allocation4], 1024
    $region21: #{fairgnn_all_forward.2} parent=1 // pred_fallthru
      _
    %p33 = scmp.eq.s32.totalorder 0, 0
    %p34 = scmp.eq.s32.totalorder 0, 0
    %p35 = pnand %p33, %p34
    %p36 = pneg %p35
    // Predicated region
    $region22: #{fairgnn_all_forward.2} parent=1 // pred_check
      _
    $region23: #{fairgnn_all_forward.2} parent=1 // pred_check_branch
      %38 = sbr.rel (%p35) target = $region25
    $region24: #{fairgnn_all_forward.2} parent=1 // pred_region
      %v39 = vld [vmem:[%s0] sm:$0xf]
      %v40 = vld [vmem:[%s0 + $0x4] sm:$0xf]
      %v41 = vld [vmem:[%s0 + $0x8] sm:$0xf]
      %v42 = vld [vmem:[%s0 + $0xc] sm:$0xf]
      %v43 = vld [vmem:[%s0 + $0x10] sm:$0xf]
      %v44 = vld [vmem:[%s0 + $0x14] sm:$0xf]
      %v45 = vld [vmem:[%s0 + $0x18] sm:$0xf]
      %v46 = vld [vmem:[%s0 + $0x1c] sm:$0xf]
      %v47 = vld [vmem:[%s0 + $0x20] sm:$0xf]
      %v48 = vld [vmem:[%s0 + $0x24] sm:$0xf]
      %v49 = vld [vmem:[%s0 + $0x28] sm:$0xf]
      %v50 = vld [vmem:[%s0 + $0x2c] sm:$0xf]
      %v51 = vld [vmem:[%s0 + $0x30] sm:$0xf]
      %v52 = vld [vmem:[%s0 + $0x34] sm:$0xf]
      %v53 = vld [vmem:[%s0 + $0x38] sm:$0xf]
      %v54 = vld [vmem:[%s0 + $0x3c] sm:$0xf]
      %v55 = vld [vmem:[%s1] sm:$0xf]
      %v56 = vld [vmem:[%s1 + $0x4] sm:$0xf]
      %v57 = vld [vmem:[%s1 + $0x8] sm:$0xf]
      %v58 = vld [vmem:[%s1 + $0xc] sm:$0xf]
      %v59 = vld [vmem:[%s1 + $0x10] sm:$0xf]
      %v60 = vld [vmem:[%s1 + $0x14] sm:$0xf]
      %v61 = vld [vmem:[%s1 + $0x18] sm:$0xf]
      %v62 = vld [vmem:[%s1 + $0x1c] sm:$0xf]
      %v63 = vld [vmem:[%s1 + $0x20] sm:$0xf]
      %v64 = vld [vmem:[%s1 + $0x24] sm:$0xf]
      %v65 = vld [vmem:[%s1 + $0x28] sm:$0xf]
      %v66 = vld [vmem:[%s1 + $0x2c] sm:$0xf]
      %v67 = vld [vmem:[%s1 + $0x30] sm:$0xf]
      %v68 = vld [vmem:[%s1 + $0x34] sm:$0xf]
      %v69 = vld [vmem:[%s1 + $0x38] sm:$0xf]
      %v70 = vld [vmem:[%s1 + $0x3c] sm:$0xf]
      %v87 = vunpack.c.l.b16 %v39
      %v88 = vunpack.c.l.b16 %v40
      %v89 = vunpack.c.l.b16 %v41
      %v90 = vunpack.c.l.b16 %v42
      %v91 = vunpack.c.l.b16 %v43
      %v92 = vunpack.c.l.b16 %v44
      %v93 = vunpack.c.l.b16 %v45
      %v94 = vunpack.c.l.b16 %v46
      %v95 = vunpack.c.l.b16 %v47
      %v96 = vunpack.c.l.b16 %v48
      %v97 = vunpack.c.l.b16 %v49
      %v98 = vunpack.c.l.b16 %v50
      %v99 = vunpack.c.l.b16 %v51
      %v100 = vunpack.c.l.b16 %v52
      %v101 = vunpack.c.l.b16 %v53
      %v102 = vunpack.c.l.b16 %v54
      %v103 = vpack.c.b16 %v88, %v87
      %v104 = vpack.c.b16 %v90, %v89
      %v105 = vpack.c.b16 %v92, %v91
      %v106 = vpack.c.b16 %v94, %v93
      %v107 = vpack.c.b16 %v96, %v95
      %v108 = vpack.c.b16 %v98, %v97
      %v109 = vpack.c.b16 %v100, %v99
      %v110 = vpack.c.b16 %v102, %v101
      %v135 = vunpack.c.l.b16 %v55
      %v136 = vunpack.c.l.b16 %v56
      %v137 = vunpack.c.l.b16 %v57
      %v138 = vunpack.c.l.b16 %v58
      %v139 = vunpack.c.l.b16 %v59
      %v140 = vunpack.c.l.b16 %v60
      %v141 = vunpack.c.l.b16 %v61
      %v142 = vunpack.c.l.b16 %v62
      %v143 = vunpack.c.l.b16 %v63
      %v144 = vunpack.c.l.b16 %v64
      %v145 = vunpack.c.l.b16 %v65
      %v146 = vunpack.c.l.b16 %v66
      %v147 = vunpack.c.l.b16 %v67
      %v148 = vunpack.c.l.b16 %v68
      %v149 = vunpack.c.l.b16 %v69
      %v150 = vunpack.c.l.b16 %v70
      %v151 = vpack.c.b16 %v136, %v135
      %v152 = vpack.c.b16 %v138, %v137
      %v153 = vpack.c.b16 %v140, %v139
      %v154 = vpack.c.b16 %v142, %v141
      %v155 = vpack.c.b16 %v144, %v143
      %v156 = vpack.c.b16 %v146, %v145
      %v157 = vpack.c.b16 %v148, %v147
      %v158 = vpack.c.b16 %v150, %v149
      %167 = vmatpush.bf16.msra.mxu0 %v158
      %168 = vmatpush.bf16.msra.mxu0 %v157
      %169 = vmatpush.bf16.msra.mxu0 %v156
      %170 = vmatpush.bf16.msra.mxu0 %v155
      %171 = vmatpush.bf16.msra.mxu0 %v154
      %172 = vmatpush.bf16.msra.mxu0 %v153
      %173 = vmatpush.bf16.msra.mxu0 %v152
      %174 = vmatpush.bf16.msra.mxu0 %v151
      %175 = vmatmul.bf16.gmra.mxu0 %v103
      %v176 = vpop.f32.mrf.mxu0
      %v177 = vadd.f32 0.0, %v176
      %v178 = vpop.f32.mrf.mxu0
      %v179 = vadd.f32 0.0, %v178
      %180 = vmatmul.bf16.gmra.mxu0 %v104
      %v181 = vpop.f32.mrf.mxu0
      %v182 = vadd.f32 0.0, %v181
      %v183 = vpop.f32.mrf.mxu0
      %v184 = vadd.f32 0.0, %v183
      %185 = vmatmul.bf16.gmra.mxu0 %v105
      %v186 = vpop.f32.mrf.mxu0
      %v187 = vadd.f32 0.0, %v186
      %v188 = vpop.f32.mrf.mxu0
      %v189 = vadd.f32 0.0, %v188
      %190 = vmatmul.bf16.gmra.mxu0 %v106
      %v191 = vpop.f32.mrf.mxu0
      %v192 = vadd.f32 0.0, %v191
      %v193 = vpop.f32.mrf.mxu0
      %v194 = vadd.f32 0.0, %v193
      %195 = vmatmul.bf16.gmra.mxu0 %v107
      %v196 = vpop.f32.mrf.mxu0
      %v197 = vadd.f32 0.0, %v196
      %v198 = vpop.f32.mrf.mxu0
      %v199 = vadd.f32 0.0, %v198
      %200 = vmatmul.bf16.gmra.mxu0 %v108
      %v201 = vpop.f32.mrf.mxu0
      %v202 = vadd.f32 0.0, %v201
      %v203 = vpop.f32.mrf.mxu0
      %v204 = vadd.f32 0.0, %v203
      %205 = vmatmul.bf16.gmra.mxu0 %v109
      %v206 = vpop.f32.mrf.mxu0
      %v207 = vadd.f32 0.0, %v206
      %v208 = vpop.f32.mrf.mxu0
      %v209 = vadd.f32 0.0, %v208
      %210 = vmatmul.bf16.gmra.mxu0 %v110
      %v211 = vpop.f32.mrf.mxu0
      %v212 = vadd.f32 0.0, %v211
      %v213 = vpop.f32.mrf.mxu0
      %v214 = vadd.f32 0.0, %v213
      %215 = vdwg.mxu0
      %v216 = vpack.c.bf16 %v177, %v177
      %v217 = vpack.c.bf16 %v179, %v179
      %v218 = vpack.c.bf16 %v182, %v182
      %v219 = vpack.c.bf16 %v184, %v184
      %v220 = vpack.c.bf16 %v187, %v187
      %v221 = vpack.c.bf16 %v189, %v189
      %v222 = vpack.c.bf16 %v192, %v192
      %v223 = vpack.c.bf16 %v194, %v194
      %v224 = vpack.c.bf16 %v197, %v197
      %v225 = vpack.c.bf16 %v199, %v199
      %v226 = vpack.c.bf16 %v202, %v202
      %v227 = vpack.c.bf16 %v204, %v204
      %v228 = vpack.c.bf16 %v207, %v207
      %v229 = vpack.c.bf16 %v209, %v209
      %v230 = vpack.c.bf16 %v212, %v212
      %v231 = vpack.c.bf16 %v214, %v214
      %232 = vst [vmem:[#allocation2] sm:$0xf] %v216
      %233 = vst [vmem:[#allocation2 + $0x4] sm:$0xf] %v217
      %234 = vst [vmem:[#allocation2 + $0x8] sm:$0xf] %v218
      %235 = vst [vmem:[#allocation2 + $0xc] sm:$0xf] %v219
      %236 = vst [vmem:[#allocation2 + $0x10] sm:$0xf] %v220
      %237 = vst [vmem:[#allocation2 + $0x14] sm:$0xf] %v221
      %238 = vst [vmem:[#allocation2 + $0x18] sm:$0xf] %v222
      %239 = vst [vmem:[#allocation2 + $0x1c] sm:$0xf] %v223
      %240 = vst [vmem:[#allocation2 + $0x20] sm:$0xf] %v224
      %241 = vst [vmem:[#allocation2 + $0x24] sm:$0xf] %v225
      %242 = vst [vmem:[#allocation2 + $0x28] sm:$0xf] %v226
      %243 = vst [vmem:[#allocation2 + $0x2c] sm:$0xf] %v227
      %244 = vst [vmem:[#allocation2 + $0x30] sm:$0xf] %v228
      %245 = vst [vmem:[#allocation2 + $0x34] sm:$0xf] %v229
      %246 = vst [vmem:[#allocation2 + $0x38] sm:$0xf] %v230
      %247 = vst [vmem:[#allocation2 + $0x3c] sm:$0xf] %v231
    $region25: #{fairgnn_all_forward.2} parent=1 // pred_fallthru
      _
    // Predicated region
    $region26: #{fairgnn_all_forward.2} parent=1 // pred_check
      %p248 = pneg %p34
    $region27: #{fairgnn_all_forward.2} parent=1 // pred_check_branch
      %250 = sbr.rel (%p248) target = $region29
    $region28: #{fairgnn_all_forward.2} parent=1 // pred_region
      %251 = vst [vmem:[%s4] sm:$0xff] 0.0
      %252 = vst [vmem:[%s4 + $0x8] sm:$0xff] 0.0
      %253 = vst [vmem:[%s4 + $0x10] sm:$0xff] 0.0
      %254 = vst [vmem:[%s4 + $0x18] sm:$0xff] 0.0
      %255 = vst [vmem:[%s4 + $0x20] sm:$0xff] 0.0
      %256 = vst [vmem:[%s4 + $0x28] sm:$0xff] 0.0
      %257 = vst [vmem:[%s4 + $0x30] sm:$0xff] 0.0
      %258 = vst [vmem:[%s4 + $0x38] sm:$0xff] 0.0
      %259 = vst [vmem:[%s4 + $0x40] sm:$0xff] 0.0
      %260 = vst [vmem:[%s4 + $0x48] sm:$0xff] 0.0
      %261 = vst [vmem:[%s4 + $0x50] sm:$0xff] 0.0
      %262 = vst [vmem:[%s4 + $0x58] sm:$0xff] 0.0
      %263 = vst [vmem:[%s4 + $0x60] sm:$0xff] 0.0
      %264 = vst [vmem:[%s4 + $0x68] sm:$0xff] 0.0
      %265 = vst [vmem:[%s4 + $0x70] sm:$0xff] 0.0
      %266 = vst [vmem:[%s4 + $0x78] sm:$0xff] 0.0
    $region29: #{fairgnn_all_forward.2} parent=1 // pred_fallthru
      _
    %s267 = smul.u32 0, 128
    %v268 = vld [vmem:[%s4] sm:$0xff]
    %v269 = vld [vmem:[%s4 + $0x8] sm:$0xff]
    %v270 = vld [vmem:[%s4 + $0x10] sm:$0xff]
    %v271 = vld [vmem:[%s4 + $0x18] sm:$0xff]
    %v272 = vld [vmem:[%s4 + $0x20] sm:$0xff]
    %v273 = vld [vmem:[%s4 + $0x28] sm:$0xff]
    %v274 = vld [vmem:[%s4 + $0x30] sm:$0xff]
    %v275 = vld [vmem:[%s4 + $0x38] sm:$0xff]
    %v276 = vld [vmem:[%s4 + $0x40] sm:$0xff]
    %v277 = vld [vmem:[%s4 + $0x48] sm:$0xff]
    %v278 = vld [vmem:[%s4 + $0x50] sm:$0xff]
    %v279 = vld [vmem:[%s4 + $0x58] sm:$0xff]
    %v280 = vld [vmem:[%s4 + $0x60] sm:$0xff]
    %v281 = vld [vmem:[%s4 + $0x68] sm:$0xff]
    %v282 = vld [vmem:[%s4 + $0x70] sm:$0xff]
    %v283 = vld [vmem:[%s4 + $0x78] sm:$0xff]
    %v284 = vld [vmem:[#allocation3] sm:$0xf]
    %v285 = vld [vmem:[#allocation3 + $0x4] sm:$0xf]
    %v286 = vld [vmem:[#allocation3 + $0x8] sm:$0xf]
    %v287 = vld [vmem:[#allocation3 + $0xc] sm:$0xf]
    %v288 = vld [vmem:[#allocation3 + $0x10] sm:$0xf]
    %v289 = vld [vmem:[#allocation3 + $0x14] sm:$0xf]
    %v290 = vld [vmem:[#allocation3 + $0x18] sm:$0xf]
    %v291 = vld [vmem:[#allocation3 + $0x1c] sm:$0xf]
    %v292 = vld [vmem:[#allocation3 + $0x20] sm:$0xf]
    %v293 = vld [vmem:[#allocation3 + $0x24] sm:$0xf]
    %v294 = vld [vmem:[#allocation3 + $0x28] sm:$0xf]
    %v295 = vld [vmem:[#allocation3 + $0x2c] sm:$0xf]
    %v296 = vld [vmem:[#allocation3 + $0x30] sm:$0xf]
    %v297 = vld [vmem:[#allocation3 + $0x34] sm:$0xf]
    %v298 = vld [vmem:[#allocation3 + $0x38] sm:$0xf]
    %v299 = vld [vmem:[#allocation3 + $0x3c] sm:$0xf]
    %s300 = sshra.s32 %s267, 3
    %s301 = sand.u32 %s267, 7
    %s302 = smul.addr %s300, 4
    %s303 = scalar_lea.vmem [#allocation2], %s302
    %v304 = vld [vmem:[%s303] sm:$0xf]
    %v305 = vld [vmem:[%s303 + $0x4] sm:$0xf]
    %v306 = vld [vmem:[%s303 + $0x8] sm:$0xf]
    %v307 = vld [vmem:[%s303 + $0xc] sm:$0xf]
    %v308 = vld [vmem:[%s303 + $0x10] sm:$0xf]
    %v309 = vld [vmem:[%s303 + $0x14] sm:$0xf]
    %v310 = vld [vmem:[%s303 + $0x18] sm:$0xf]
    %v311 = vld [vmem:[%s303 + $0x1c] sm:$0xf]
    %v312 = vld [vmem:[%s303 + $0x20] sm:$0xf]
    %v313 = vld [vmem:[%s303 + $0x24] sm:$0xf]
    %v314 = vld [vmem:[%s303 + $0x28] sm:$0xf]
    %v315 = vld [vmem:[%s303 + $0x2c] sm:$0xf]
    %v316 = vld [vmem:[%s303 + $0x30] sm:$0xf]
    %v317 = vld [vmem:[%s303 + $0x34] sm:$0xf]
    %v318 = vld [vmem:[%s303 + $0x38] sm:$0xf]
    %v319 = vld [vmem:[%s303 + $0x3c] sm:$0xf]
    %v336 = vunpack.c.l.b16 %v284
    %v337 = vunpack.c.l.b16 %v285
    %v338 = vunpack.c.l.b16 %v286
    %v339 = vunpack.c.l.b16 %v287
    %v340 = vunpack.c.l.b16 %v288
    %v341 = vunpack.c.l.b16 %v289
    %v342 = vunpack.c.l.b16 %v290
    %v343 = vunpack.c.l.b16 %v291
    %v344 = vunpack.c.l.b16 %v292
    %v345 = vunpack.c.l.b16 %v293
    %v346 = vunpack.c.l.b16 %v294
    %v347 = vunpack.c.l.b16 %v295
    %v348 = vunpack.c.l.b16 %v296
    %v349 = vunpack.c.l.b16 %v297
    %v350 = vunpack.c.l.b16 %v298
    %v351 = vunpack.c.l.b16 %v299
    %v352 = vpack.c.b16 %v337, %v336
    %v353 = vpack.c.b16 %v339, %v338
    %v354 = vpack.c.b16 %v341, %v340
    %v355 = vpack.c.b16 %v343, %v342
    %v356 = vpack.c.b16 %v345, %v344
    %v357 = vpack.c.b16 %v347, %v346
    %v358 = vpack.c.b16 %v349, %v348
    %v359 = vpack.c.b16 %v351, %v350
    %v384 = vunpack.c.l.b16 %v304
    %v385 = vunpack.c.l.b16 %v305
    %v386 = vunpack.c.l.b16 %v306
    %v387 = vunpack.c.l.b16 %v307
    %v388 = vunpack.c.l.b16 %v308
    %v389 = vunpack.c.l.b16 %v309
    %v390 = vunpack.c.l.b16 %v310
    %v391 = vunpack.c.l.b16 %v311
    %v392 = vunpack.c.l.b16 %v312
    %v393 = vunpack.c.l.b16 %v313
    %v394 = vunpack.c.l.b16 %v314
    %v395 = vunpack.c.l.b16 %v315
    %v396 = vunpack.c.l.b16 %v316
    %v397 = vunpack.c.l.b16 %v317
    %v398 = vunpack.c.l.b16 %v318
    %v399 = vunpack.c.l.b16 %v319
    %v400 = vpack.c.b16 %v385, %v384
    %v401 = vpack.c.b16 %v387, %v386
    %v402 = vpack.c.b16 %v389, %v388
    %v403 = vpack.c.b16 %v391, %v390
    %v404 = vpack.c.b16 %v393, %v392
    %v405 = vpack.c.b16 %v395, %v394
    %v406 = vpack.c.b16 %v397, %v396
    %v407 = vpack.c.b16 %v399, %v398
    %416 = vmatpush.bf16.msra.mxu0 %v407
    %417 = vmatpush.bf16.msra.mxu0 %v406
    %418 = vmatpush.bf16.msra.mxu0 %v405
    %419 = vmatpush.bf16.msra.mxu0 %v404
    %420 = vmatpush.bf16.msra.mxu0 %v403
    %421 = vmatpush.bf16.msra.mxu0 %v402
    %422 = vmatpush.bf16.msra.mxu0 %v401
    %423 = vmatpush.bf16.msra.mxu0 %v400
    %424 = vmatmul.bf16.gmra.mxu0 %v352
    %v425 = vpop.f32.mrf.mxu0
    %v426 = vadd.f32 0.0, %v425
    %v427 = vpop.f32.mrf.mxu0
    %v428 = vadd.f32 0.0, %v427
    %429 = vmatmul.bf16.gmra.mxu0 %v353
    %v430 = vpop.f32.mrf.mxu0
    %v431 = vadd.f32 0.0, %v430
    %v432 = vpop.f32.mrf.mxu0
    %v433 = vadd.f32 0.0, %v432
    %434 = vmatmul.bf16.gmra.mxu0 %v354
    %v435 = vpop.f32.mrf.mxu0
    %v436 = vadd.f32 0.0, %v435
    %v437 = vpop.f32.mrf.mxu0
    %v438 = vadd.f32 0.0, %v437
    %439 = vmatmul.bf16.gmra.mxu0 %v355
    %v440 = vpop.f32.mrf.mxu0
    %v441 = vadd.f32 0.0, %v440
    %v442 = vpop.f32.mrf.mxu0
    %v443 = vadd.f32 0.0, %v442
    %444 = vmatmul.bf16.gmra.mxu0 %v356
    %v445 = vpop.f32.mrf.mxu0
    %v446 = vadd.f32 0.0, %v445
    %v447 = vpop.f32.mrf.mxu0
    %v448 = vadd.f32 0.0, %v447
    %449 = vmatmul.bf16.gmra.mxu0 %v357
    %v450 = vpop.f32.mrf.mxu0
    %v451 = vadd.f32 0.0, %v450
    %v452 = vpop.f32.mrf.mxu0
    %v453 = vadd.f32 0.0, %v452
    %454 = vmatmul.bf16.gmra.mxu0 %v358
    %v455 = vpop.f32.mrf.mxu0
    %v456 = vadd.f32 0.0, %v455
    %v457 = vpop.f32.mrf.mxu0
    %v458 = vadd.f32 0.0, %v457
    %459 = vmatmul.bf16.gmra.mxu0 %v359
    %v460 = vpop.f32.mrf.mxu0
    %v461 = vadd.f32 0.0, %v460
    %v462 = vpop.f32.mrf.mxu0
    %v463 = vadd.f32 0.0, %v462
    %464 = vdwg.mxu0
    %v465 = vadd.f32 %v268, %v426
    %v466 = vadd.f32 %v269, %v428
    %v467 = vadd.f32 %v270, %v431
    %v468 = vadd.f32 %v271, %v433
    %v469 = vadd.f32 %v272, %v436
    %v470 = vadd.f32 %v273, %v438
    %v471 = vadd.f32 %v274, %v441
    %v472 = vadd.f32 %v275, %v443
    %v473 = vadd.f32 %v276, %v446
    %v474 = vadd.f32 %v277, %v448
    %v475 = vadd.f32 %v278, %v451
    %v476 = vadd.f32 %v279, %v453
    %v477 = vadd.f32 %v280, %v456
    %v478 = vadd.f32 %v281, %v458
    %v479 = vadd.f32 %v282, %v461
    %v480 = vadd.f32 %v283, %v463
    %481 = vst [vmem:[%s4] sm:$0xff] %v465
    %482 = vst [vmem:[%s4 + $0x8] sm:$0xff] %v466
    %483 = vst [vmem:[%s4 + $0x10] sm:$0xff] %v467
    %484 = vst [vmem:[%s4 + $0x18] sm:$0xff] %v468
    %485 = vst [vmem:[%s4 + $0x20] sm:$0xff] %v469
    %486 = vst [vmem:[%s4 + $0x28] sm:$0xff] %v470
    %487 = vst [vmem:[%s4 + $0x30] sm:$0xff] %v471
    %488 = vst [vmem:[%s4 + $0x38] sm:$0xff] %v472
    %489 = vst [vmem:[%s4 + $0x40] sm:$0xff] %v473
    %490 = vst [vmem:[%s4 + $0x48] sm:$0xff] %v474
    %491 = vst [vmem:[%s4 + $0x50] sm:$0xff] %v475
    %492 = vst [vmem:[%s4 + $0x58] sm:$0xff] %v476
    %493 = vst [vmem:[%s4 + $0x60] sm:$0xff] %v477
    %494 = vst [vmem:[%s4 + $0x68] sm:$0xff] %v478
    %495 = vst [vmem:[%s4 + $0x70] sm:$0xff] %v479
    %496 = vst [vmem:[%s4 + $0x78] sm:$0xff] %v480
    // Predicated region
    $region30: #{fairgnn_all_forward.2} parent=1 // pred_check
      %p497 = pneg %p34
    $region31: #{fairgnn_all_forward.2} parent=1 // pred_check_branch
      %499 = sbr.rel (%p497) target = $region33
    $region32: #{fairgnn_all_forward.2} parent=1 // pred_region
      %v500 = vld [vmem:[%s4] sm:$0xff]
      %v501 = vld [vmem:[%s4 + $0x8] sm:$0xff]
      %v502 = vld [vmem:[%s4 + $0x10] sm:$0xff]
      %v503 = vld [vmem:[%s4 + $0x18] sm:$0xff]
      %v504 = vld [vmem:[%s4 + $0x20] sm:$0xff]
      %v505 = vld [vmem:[%s4 + $0x28] sm:$0xff]
      %v506 = vld [vmem:[%s4 + $0x30] sm:$0xff]
      %v507 = vld [vmem:[%s4 + $0x38] sm:$0xff]
      %v508 = vld [vmem:[%s4 + $0x40] sm:$0xff]
      %v509 = vld [vmem:[%s4 + $0x48] sm:$0xff]
      %v510 = vld [vmem:[%s4 + $0x50] sm:$0xff]
      %v511 = vld [vmem:[%s4 + $0x58] sm:$0xff]
      %v512 = vld [vmem:[%s4 + $0x60] sm:$0xff]
      %v513 = vld [vmem:[%s4 + $0x68] sm:$0xff]
      %v514 = vld [vmem:[%s4 + $0x70] sm:$0xff]
      %v515 = vld [vmem:[%s4 + $0x78] sm:$0xff]
      %v516 = vld [vmem:[%s2] sm:$0x1]
      %v518 = vperm.slane %v516, 0
      %v520 = vadd.f32 %v500, %v518
      %v521 = vadd.f32 %v501, %v518
      %v522 = vadd.f32 %v502, %v518
      %v523 = vadd.f32 %v503, %v518
      %v524 = vadd.f32 %v504, %v518
      %v525 = vadd.f32 %v505, %v518
      %v526 = vadd.f32 %v506, %v518
      %v527 = vadd.f32 %v507, %v518
      %v528 = vadd.f32 %v508, %v518
      %v529 = vadd.f32 %v509, %v518
      %v530 = vadd.f32 %v510, %v518
      %v531 = vadd.f32 %v511, %v518
      %v532 = vadd.f32 %v512, %v518
      %v533 = vadd.f32 %v513, %v518
      %v534 = vadd.f32 %v514, %v518
      %v535 = vadd.f32 %v515, %v518
      %v536 = vlaneseq
      %v537 = vand.u32 %v536, 127
      %vm538 = vcmp.lt.s32.totalorder %v537, 1
      %v539 = vmax.f32 %v520, 0.0
      %v540 = vmax.f32 %v521, 0.0
      %v541 = vmax.f32 %v522, 0.0
      %v542 = vmax.f32 %v523, 0.0
      %v543 = vmax.f32 %v524, 0.0
      %v544 = vmax.f32 %v525, 0.0
      %v545 = vmax.f32 %v526, 0.0
      %v546 = vmax.f32 %v527, 0.0
      %v547 = vmax.f32 %v528, 0.0
      %v548 = vmax.f32 %v529, 0.0
      %v549 = vmax.f32 %v530, 0.0
      %v550 = vmax.f32 %v531, 0.0
      %v551 = vmax.f32 %v532, 0.0
      %v552 = vmax.f32 %v533, 0.0
      %v553 = vmax.f32 %v534, 0.0
      %v554 = vmax.f32 %v535, 0.0
      %v555 = vsel %vm538, %v520, %v539
      %v556 = vsel %vm538, %v521, %v540
      %v557 = vsel %vm538, %v522, %v541
      %v558 = vsel %vm538, %v523, %v542
      %v559 = vsel %vm538, %v524, %v543
      %v560 = vsel %vm538, %v525, %v544
      %v561 = vsel %vm538, %v526, %v545
      %v562 = vsel %vm538, %v527, %v546
      %v563 = vsel %vm538, %v528, %v547
      %v564 = vsel %vm538, %v529, %v548
      %v565 = vsel %vm538, %v530, %v549
      %v566 = vsel %vm538, %v531, %v550
      %v567 = vsel %vm538, %v532, %v551
      %v568 = vsel %vm538, %v533, %v552
      %v569 = vsel %vm538, %v534, %v553
      %v570 = vsel %vm538, %v535, %v554
      %571 = vst [vmem:[%s4] sm:$0xff] %v555
      %572 = vst [vmem:[%s4 + $0x8] sm:$0xff] %v556
      %573 = vst [vmem:[%s4 + $0x10] sm:$0xff] %v557
      %574 = vst [vmem:[%s4 + $0x18] sm:$0xff] %v558
      %575 = vst [vmem:[%s4 + $0x20] sm:$0xff] %v559
      %576 = vst [vmem:[%s4 + $0x28] sm:$0xff] %v560
      %577 = vst [vmem:[%s4 + $0x30] sm:$0xff] %v561
      %578 = vst [vmem:[%s4 + $0x38] sm:$0xff] %v562
      %579 = vst [vmem:[%s4 + $0x40] sm:$0xff] %v563
      %580 = vst [vmem:[%s4 + $0x48] sm:$0xff] %v564
      %581 = vst [vmem:[%s4 + $0x50] sm:$0xff] %v565
      %582 = vst [vmem:[%s4 + $0x58] sm:$0xff] %v566
      %583 = vst [vmem:[%s4 + $0x60] sm:$0xff] %v567
      %584 = vst [vmem:[%s4 + $0x68] sm:$0xff] %v568
      %585 = vst [vmem:[%s4 + $0x70] sm:$0xff] %v569
      %586 = vst [vmem:[%s4 + $0x78] sm:$0xff] %v570
    $region33: #{fairgnn_all_forward.2} parent=1 // pred_fallthru
      _
    // Predicated region
    $region34: #{fairgnn_all_forward.2} parent=1 // pred_check
      _
    $region35: #{fairgnn_all_forward.2} parent=1 // pred_check_branch
      %588 = sbr.rel (0) target = $region37
    $region36: #{fairgnn_all_forward.2} parent=1 // pred_region
      _
    $region37: #{fairgnn_all_forward.2} parent=1 // pred_fallthru
      _
    // Predicated region
    $region38: #{fairgnn_all_forward.2} parent=1 // pred_check
      _
    $region39: #{fairgnn_all_forward.2} parent=1 // pred_check_branch
      %590 = sbr.rel (0) target = $region41
    $region40: #{fairgnn_all_forward.2} parent=1 // pred_region
      _
    $region41: #{fairgnn_all_forward.2} parent=1 // pred_fallthru
      _
    %591 = vsyncpa [#allocation4], 1

// kernel: fairgnn_all_forward.3
$region0: #{fairgnn_all_forward.3}
  #allocation0 [shape = 'u32[]', space=smem, size = 0x4, offset = 0x4, fixed_abs, tag = 'smem constant byte address 0x4 - core index']
  #allocation1 [shape = 'u32[72,128]{1,0:T(1,128)}', space=vmem, size = 0x9000, scoped, tag = 'internal scratch']
  #allocation2 [shape = 'bf16[128,128]{1,0:T(8,128)(2,1)}', space=vmem, size = 0x8000, scoped, tag = 'scratch operand']
  %s0 = inlined_call_operand.vmem [shape: f32[128,128], index: 0, kind: input, shape index: {}]
  %s1 = inlined_call_operand.vmem [shape: bf16[128,128], index: 1, kind: input, shape index: {}]
  %s2 = inlined_call_operand.vmem [shape: f32[1,128], index: 2, kind: input, shape index: {}]
  %s3 = inlined_call_operand.vmem [shape: bf16[128,128], index: 3, kind: input, shape index: {}]
  %s4 = inlined_call_operand.vmem [shape: bf16[128,128], index: 4, kind: input, shape index: {}]
  %s5 = inlined_call_operand.vmem [shape: f32[1,128], index: 5, kind: input, shape index: {}]
  %s6 = inlined_call_operand.vmem [shape: bf16[128,128], index: 6, kind: input, shape index: {}]
  %s7 = inlined_call_operand.vmem [shape: f32[1,128], index: 7, kind: input, shape index: {}]
  %s8 = inlined_call_operand.vmem [shape: f32[128,128], index: 8, kind: output, shape index: {0}]
  %s9 = inlined_call_operand.vmem [shape: f32[128,128], index: 9, kind: output, shape index: {1}]
  %10 = xla_tuple %s8, %s9
  %s11 = sld [smem:[#allocation0]]
  $region62: #{fairgnn_all_forward.3} parent=0
    _
  %s13 = ssub.s32 1, %s11
  %s14 = scalar_select 0, %s13, %s11
  // Predicated region
  $region2: #{fairgnn_all_forward.3} parent=0 // pred_check
    _
  $region3: #{fairgnn_all_forward.3} parent=0 // pred_check_branch
    %16 = sbr.rel (0) target = $region5
  $region4: #{fairgnn_all_forward.3} parent=0 // pred_region
    _
  $region5: #{fairgnn_all_forward.3} parent=0 // pred_fallthru
    _
  // Predicated region
  $region6: #{fairgnn_all_forward.3} parent=0 // pred_check
    _
  $region7: #{fairgnn_all_forward.3} parent=0 // pred_check_branch
    %18 = sbr.rel (0) target = $region9
  $region8: #{fairgnn_all_forward.3} parent=0 // pred_region
    _
  $region9: #{fairgnn_all_forward.3} parent=0 // pred_fallthru
    _
  // Predicated region
  $region10: #{fairgnn_all_forward.3} parent=0 // pred_check
    _
  $region11: #{fairgnn_all_forward.3} parent=0 // pred_check_branch
    %20 = sbr.rel (0) target = $region13
  $region12: #{fairgnn_all_forward.3} parent=0 // pred_region
    _
  $region13: #{fairgnn_all_forward.3} parent=0 // pred_fallthru
    _
  // Predicated region
  $region14: #{fairgnn_all_forward.3} parent=0 // pred_check
    _
  $region15: #{fairgnn_all_forward.3} parent=0 // pred_check_branch
    %22 = sbr.rel (0) target = $region17
  $region16: #{fairgnn_all_forward.3} parent=0 // pred_region
    _
  $region17: #{fairgnn_all_forward.3} parent=0 // pred_fallthru
    _
  // Predicated region
  $region18: #{fairgnn_all_forward.3} parent=0 // pred_check
    _
  $region19: #{fairgnn_all_forward.3} parent=0 // pred_check_branch
    %24 = sbr.rel (0) target = $region21
  $region20: #{fairgnn_all_forward.3} parent=0 // pred_region
    _
  $region21: #{fairgnn_all_forward.3} parent=0 // pred_fallthru
    _
  // Predicated region
  $region22: #{fairgnn_all_forward.3} parent=0 // pred_check
    _
  $region23: #{fairgnn_all_forward.3} parent=0 // pred_check_branch
    %26 = sbr.rel (0) target = $region25
  $region24: #{fairgnn_all_forward.3} parent=0 // pred_region
    _
  $region25: #{fairgnn_all_forward.3} parent=0 // pred_fallthru
    _
  // Predicated region
  $region26: #{fairgnn_all_forward.3} parent=0 // pred_check
    _
  $region27: #{fairgnn_all_forward.3} parent=0 // pred_check_branch
    %28 = sbr.rel (0) target = $region29
  $region28: #{fairgnn_all_forward.3} parent=0 // pred_region
    _
  $region29: #{fairgnn_all_forward.3} parent=0 // pred_fallthru
    _
  // Predicated region
  $region30: #{fairgnn_all_forward.3} parent=0 // pred_check
    _
  $region31: #{fairgnn_all_forward.3} parent=0 // pred_check_branch
    %30 = sbr.rel (0) target = $region33
  $region32: #{fairgnn_all_forward.3} parent=0 // pred_region
    _
  $region33: #{fairgnn_all_forward.3} parent=0 // pred_fallthru
    _
  %p31 = scmp.eq.s32.totalorder 0, 0
  %p32 = scmp.eq.s32.totalorder 0, 0
  %p33 = pnand %p31, %p32
  %p34 = pneg %p33
  // Predicated region
  $region34: #{fairgnn_all_forward.3} parent=0 // pred_check
    _
  $region35: #{fairgnn_all_forward.3} parent=0 // pred_check_branch
    %36 = sbr.rel (%p33) target = $region37
  $region36: #{fairgnn_all_forward.3} parent=0 // pred_region
    %v37 = vld [vmem:[%s0] sm:$0xff]
    %v38 = vld [vmem:[%s0 + $0x8] sm:$0xff]
    %v39 = vld [vmem:[%s0 + $0x10] sm:$0xff]
    %v40 = vld [vmem:[%s0 + $0x18] sm:$0xff]
    %v41 = vld [vmem:[%s0 + $0x20] sm:$0xff]
    %v42 = vld [vmem:[%s0 + $0x28] sm:$0xff]
    %v43 = vld [vmem:[%s0 + $0x30] sm:$0xff]
    %v44 = vld [vmem:[%s0 + $0x38] sm:$0xff]
    %v45 = vld [vmem:[%s0 + $0x40] sm:$0xff]
    %v46 = vld [vmem:[%s0 + $0x48] sm:$0xff]
    %v47 = vld [vmem:[%s0 + $0x50] sm:$0xff]
    %v48 = vld [vmem:[%s0 + $0x58] sm:$0xff]
    %v49 = vld [vmem:[%s0 + $0x60] sm:$0xff]
    %v50 = vld [vmem:[%s0 + $0x68] sm:$0xff]
    %v51 = vld [vmem:[%s0 + $0x70] sm:$0xff]
    %v52 = vld [vmem:[%s0 + $0x78] sm:$0xff]
    %v53 = vpack.c.bf16 %v38, %v37
    %v54 = vpack.c.bf16 %v40, %v39
    %v55 = vpack.c.bf16 %v42, %v41
    %v56 = vpack.c.bf16 %v44, %v43
    %v57 = vpack.c.bf16 %v46, %v45
    %v58 = vpack.c.bf16 %v48, %v47
    %v59 = vpack.c.bf16 %v50, %v49
    %v60 = vpack.c.bf16 %v52, %v51
    %v61 = vld [vmem:[%s1] sm:$0xf]
    %v62 = vld [vmem:[%s1 + $0x4] sm:$0xf]
    %v63 = vld [vmem:[%s1 + $0x8] sm:$0xf]
    %v64 = vld [vmem:[%s1 + $0xc] sm:$0xf]
    %v65 = vld [vmem:[%s1 + $0x10] sm:$0xf]
    %v66 = vld [vmem:[%s1 + $0x14] sm:$0xf]
    %v67 = vld [vmem:[%s1 + $0x18] sm:$0xf]
    %v68 = vld [vmem:[%s1 + $0x1c] sm:$0xf]
    %v69 = vld [vmem:[%s1 + $0x20] sm:$0xf]
    %v70 = vld [vmem:[%s1 + $0x24] sm:$0xf]
    %v71 = vld [vmem:[%s1 + $0x28] sm:$0xf]
    %v72 = vld [vmem:[%s1 + $0x2c] sm:$0xf]
    %v73 = vld [vmem:[%s1 + $0x30] sm:$0xf]
    %v74 = vld [vmem:[%s1 + $0x34] sm:$0xf]
    %v75 = vld [vmem:[%s1 + $0x38] sm:$0xf]
    %v76 = vld [vmem:[%s1 + $0x3c] sm:$0xf]
    %v93 = vunpack.c.l.b16 %v61
    %v94 = vunpack.c.l.b16 %v62
    %v95 = vunpack.c.l.b16 %v63
    %v96 = vunpack.c.l.b16 %v64
    %v97 = vunpack.c.l.b16 %v65
    %v98 = vunpack.c.l.b16 %v66
    %v99 = vunpack.c.l.b16 %v67
    %v100 = vunpack.c.l.b16 %v68
    %v101 = vunpack.c.l.b16 %v69
    %v102 = vunpack.c.l.b16 %v70
    %v103 = vunpack.c.l.b16 %v71
    %v104 = vunpack.c.l.b16 %v72
    %v105 = vunpack.c.l.b16 %v73
    %v106 = vunpack.c.l.b16 %v74
    %v107 = vunpack.c.l.b16 %v75
    %v108 = vunpack.c.l.b16 %v76
    %v109 = vpack.c.b16 %v94, %v93
    %v110 = vpack.c.b16 %v96, %v95
    %v111 = vpack.c.b16 %v98, %v97
    %v112 = vpack.c.b16 %v100, %v99
    %v113 = vpack.c.b16 %v102, %v101
    %v114 = vpack.c.b16 %v104, %v103
    %v115 = vpack.c.b16 %v106, %v105
    %v116 = vpack.c.b16 %v108, %v107
    %125 = vmatpush.bf16.msra.mxu0 %v116
    %126 = vmatpush.bf16.msra.mxu0 %v115
    %127 = vmatpush.bf16.msra.mxu0 %v114
    %128 = vmatpush.bf16.msra.mxu0 %v113
    %129 = vmatpush.bf16.msra.mxu0 %v112
    %130 = vmatpush.bf16.msra.mxu0 %v111
    %131 = vmatpush.bf16.msra.mxu0 %v110
    %132 = vmatpush.bf16.msra.mxu0 %v109
    %133 = vmatmul.bf16.gmra.mxu0 %v53
    %v134 = vpop.f32.mrf.mxu0
    %v135 = vadd.f32 0.0, %v134
    %v136 = vpop.f32.mrf.mxu0
    %v137 = vadd.f32 0.0, %v136
    %138 = vmatmul.bf16.gmra.mxu0 %v54
    %v139 = vpop.f32.mrf.mxu0
    %v140 = vadd.f32 0.0, %v139
    %v141 = vpop.f32.mrf.mxu0
    %v142 = vadd.f32 0.0, %v141
    %143 = vmatmul.bf16.gmra.mxu0 %v55
    %v144 = vpop.f32.mrf.mxu0
    %v145 = vadd.f32 0.0, %v144
    %v146 = vpop.f32.mrf.mxu0
    %v147 = vadd.f32 0.0, %v146
    %148 = vmatmul.bf16.gmra.mxu0 %v56
    %v149 = vpop.f32.mrf.mxu0
    %v150 = vadd.f32 0.0, %v149
    %v151 = vpop.f32.mrf.mxu0
    %v152 = vadd.f32 0.0, %v151
    %153 = vmatmul.bf16.gmra.mxu0 %v57
    %v154 = vpop.f32.mrf.mxu0
    %v155 = vadd.f32 0.0, %v154
    %v156 = vpop.f32.mrf.mxu0
    %v157 = vadd.f32 0.0, %v156
    %158 = vmatmul.bf16.gmra.mxu0 %v58
    %v159 = vpop.f32.mrf.mxu0
    %v160 = vadd.f32 0.0, %v159
    %v161 = vpop.f32.mrf.mxu0
    %v162 = vadd.f32 0.0, %v161
    %163 = vmatmul.bf16.gmra.mxu0 %v59
    %v164 = vpop.f32.mrf.mxu0
    %v165 = vadd.f32 0.0, %v164
    %v166 = vpop.f32.mrf.mxu0
    %v167 = vadd.f32 0.0, %v166
    %168 = vmatmul.bf16.gmra.mxu0 %v60
    %v169 = vpop.f32.mrf.mxu0
    %v170 = vadd.f32 0.0, %v169
    %v171 = vpop.f32.mrf.mxu0
    %v172 = vadd.f32 0.0, %v171
    %173 = vdwg.mxu0
    %v174 = vpack.c.bf16 %v135, %v135
    %v175 = vpack.c.bf16 %v137, %v137
    %v176 = vpack.c.bf16 %v140, %v140
    %v177 = vpack.c.bf16 %v142, %v142
    %v178 = vpack.c.bf16 %v145, %v145
    %v179 = vpack.c.bf16 %v147, %v147
    %v180 = vpack.c.bf16 %v150, %v150
    %v181 = vpack.c.bf16 %v152, %v152
    %v182 = vpack.c.bf16 %v155, %v155
    %v183 = vpack.c.bf16 %v157, %v157
    %v184 = vpack.c.bf16 %v160, %v160
    %v185 = vpack.c.bf16 %v162, %v162
    %v186 = vpack.c.bf16 %v165, %v165
    %v187 = vpack.c.bf16 %v167, %v167
    %v188 = vpack.c.bf16 %v170, %v170
    %v189 = vpack.c.bf16 %v172, %v172
    %190 = vst [vmem:[#allocation2] sm:$0xf] %v174
    %191 = vst [vmem:[#allocation2 + $0x4] sm:$0xf] %v175
    %192 = vst [vmem:[#allocation2 + $0x8] sm:$0xf] %v176
    %193 = vst [vmem:[#allocation2 + $0xc] sm:$0xf] %v177
    %194 = vst [vmem:[#allocation2 + $0x10] sm:$0xf] %v178
    %195 = vst [vmem:[#allocation2 + $0x14] sm:$0xf] %v179
    %196 = vst [vmem:[#allocation2 + $0x18] sm:$0xf] %v180
    %197 = vst [vmem:[#allocation2 + $0x1c] sm:$0xf] %v181
    %198 = vst [vmem:[#allocation2 + $0x20] sm:$0xf] %v182
    %199 = vst [vmem:[#allocation2 + $0x24] sm:$0xf] %v183
    %200 = vst [vmem:[#allocation2 + $0x28] sm:$0xf] %v184
    %201 = vst [vmem:[#allocation2 + $0x2c] sm:$0xf] %v185
    %202 = vst [vmem:[#allocation2 + $0x30] sm:$0xf] %v186
    %203 = vst [vmem:[#allocation2 + $0x34] sm:$0xf] %v187
    %204 = vst [vmem:[#allocation2 + $0x38] sm:$0xf] %v188
    %205 = vst [vmem:[#allocation2 + $0x3c] sm:$0xf] %v189
  $region37: #{fairgnn_all_forward.3} parent=0 // pred_fallthru
    _
  // Predicated region
  $region38: #{fairgnn_all_forward.3} parent=0 // pred_check
    %p206 = pneg %p32
  $region39: #{fairgnn_all_forward.3} parent=0 // pred_check_branch
    %208 = sbr.rel (%p206) target = $region41
  $region40: #{fairgnn_all_forward.3} parent=0 // pred_region
    %209 = vst [vmem:[%s8] sm:$0xff] 0.0
    %210 = vst [vmem:[%s8 + $0x8] sm:$0xff] 0.0
    %211 = vst [vmem:[%s8 + $0x10] sm:$0xff] 0.0
    %212 = vst [vmem:[%s8 + $0x18] sm:$0xff] 0.0
    %213 = vst [vmem:[%s8 + $0x20] sm:$0xff] 0.0
    %214 = vst [vmem:[%s8 + $0x28] sm:$0xff] 0.0
    %215 = vst [vmem:[%s8 + $0x30] sm:$0xff] 0.0
    %216 = vst [vmem:[%s8 + $0x38] sm:$0xff] 0.0
    %217 = vst [vmem:[%s8 + $0x40] sm:$0xff] 0.0
    %218 = vst [vmem:[%s8 + $0x48] sm:$0xff] 0.0
    %219 = vst [vmem:[%s8 + $0x50] sm:$0xff] 0.0
    %220 = vst [vmem:[%s8 + $0x58] sm:$0xff] 0.0
    %221 = vst [vmem:[%s8 + $0x60] sm:$0xff] 0.0
    %222 = vst [vmem:[%s8 + $0x68] sm:$0xff] 0.0
    %223 = vst [vmem:[%s8 + $0x70] sm:$0xff] 0.0
    %224 = vst [vmem:[%s8 + $0x78] sm:$0xff] 0.0
  $region41: #{fairgnn_all_forward.3} parent=0 // pred_fallthru
    _
  %s225 = smul.u32 0, 128
  %v226 = vld [vmem:[%s8] sm:$0xff]
  %v227 = vld [vmem:[%s8 + $0x8] sm:$0xff]
  %v228 = vld [vmem:[%s8 + $0x10] sm:$0xff]
  %v229 = vld [vmem:[%s8 + $0x18] sm:$0xff]
  %v230 = vld [vmem:[%s8 + $0x20] sm:$0xff]
  %v231 = vld [vmem:[%s8 + $0x28] sm:$0xff]
  %v232 = vld [vmem:[%s8 + $0x30] sm:$0xff]
  %v233 = vld [vmem:[%s8 + $0x38] sm:$0xff]
  %v234 = vld [vmem:[%s8 + $0x40] sm:$0xff]
  %v235 = vld [vmem:[%s8 + $0x48] sm:$0xff]
  %v236 = vld [vmem:[%s8 + $0x50] sm:$0xff]
  %v237 = vld [vmem:[%s8 + $0x58] sm:$0xff]
  %v238 = vld [vmem:[%s8 + $0x60] sm:$0xff]
  %v239 = vld [vmem:[%s8 + $0x68] sm:$0xff]
  %v240 = vld [vmem:[%s8 + $0x70] sm:$0xff]
  %v241 = vld [vmem:[%s8 + $0x78] sm:$0xff]
  %v242 = vld [vmem:[%s3] sm:$0xf]
  %v243 = vld [vmem:[%s3 + $0x4] sm:$0xf]
  %v244 = vld [vmem:[%s3 + $0x8] sm:$0xf]
  %v245 = vld [vmem:[%s3 + $0xc] sm:$0xf]
  %v246 = vld [vmem:[%s3 + $0x10] sm:$0xf]
  %v247 = vld [vmem:[%s3 + $0x14] sm:$0xf]
  %v248 = vld [vmem:[%s3 + $0x18] sm:$0xf]
  %v249 = vld [vmem:[%s3 + $0x1c] sm:$0xf]
  %v250 = vld [vmem:[%s3 + $0x20] sm:$0xf]
  %v251 = vld [vmem:[%s3 + $0x24] sm:$0xf]
  %v252 = vld [vmem:[%s3 + $0x28] sm:$0xf]
  %v253 = vld [vmem:[%s3 + $0x2c] sm:$0xf]
  %v254 = vld [vmem:[%s3 + $0x30] sm:$0xf]
  %v255 = vld [vmem:[%s3 + $0x34] sm:$0xf]
  %v256 = vld [vmem:[%s3 + $0x38] sm:$0xf]
  %v257 = vld [vmem:[%s3 + $0x3c] sm:$0xf]
  %s258 = sshra.s32 %s225, 3
  %s259 = sand.u32 %s225, 7
  %s260 = smul.addr %s258, 4
  %s261 = scalar_lea.vmem [#allocation2], %s260
  %v262 = vld [vmem:[%s261] sm:$0xf]
  %v263 = vld [vmem:[%s261 + $0x4] sm:$0xf]
  %v264 = vld [vmem:[%s261 + $0x8] sm:$0xf]
  %v265 = vld [vmem:[%s261 + $0xc] sm:$0xf]
  %v266 = vld [vmem:[%s261 + $0x10] sm:$0xf]
  %v267 = vld [vmem:[%s261 + $0x14] sm:$0xf]
  %v268 = vld [vmem:[%s261 + $0x18] sm:$0xf]
  %v269 = vld [vmem:[%s261 + $0x1c] sm:$0xf]
  %v270 = vld [vmem:[%s261 + $0x20] sm:$0xf]
  %v271 = vld [vmem:[%s261 + $0x24] sm:$0xf]
  %v272 = vld [vmem:[%s261 + $0x28] sm:$0xf]
  %v273 = vld [vmem:[%s261 + $0x2c] sm:$0xf]
  %v274 = vld [vmem:[%s261 + $0x30] sm:$0xf]
  %v275 = vld [vmem:[%s261 + $0x34] sm:$0xf]
  %v276 = vld [vmem:[%s261 + $0x38] sm:$0xf]
  %v277 = vld [vmem:[%s261 + $0x3c] sm:$0xf]
  %v294 = vunpack.c.l.b16 %v242
  %v295 = vunpack.c.l.b16 %v243
  %v296 = vunpack.c.l.b16 %v244
  %v297 = vunpack.c.l.b16 %v245
  %v298 = vunpack.c.l.b16 %v246
  %v299 = vunpack.c.l.b16 %v247
  %v300 = vunpack.c.l.b16 %v248
  %v301 = vunpack.c.l.b16 %v249
  %v302 = vunpack.c.l.b16 %v250
  %v303 = vunpack.c.l.b16 %v251
  %v304 = vunpack.c.l.b16 %v252
  %v305 = vunpack.c.l.b16 %v253
  %v306 = vunpack.c.l.b16 %v254
  %v307 = vunpack.c.l.b16 %v255
  %v308 = vunpack.c.l.b16 %v256
  %v309 = vunpack.c.l.b16 %v257
  %v310 = vpack.c.b16 %v295, %v294
  %v311 = vpack.c.b16 %v297, %v296
  %v312 = vpack.c.b16 %v299, %v298
  %v313 = vpack.c.b16 %v301, %v300
  %v314 = vpack.c.b16 %v303, %v302
  %v315 = vpack.c.b16 %v305, %v304
  %v316 = vpack.c.b16 %v307, %v306
  %v317 = vpack.c.b16 %v309, %v308
  %v342 = vunpack.c.l.b16 %v262
  %v343 = vunpack.c.l.b16 %v263
  %v344 = vunpack.c.l.b16 %v264
  %v345 = vunpack.c.l.b16 %v265
  %v346 = vunpack.c.l.b16 %v266
  %v347 = vunpack.c.l.b16 %v267
  %v348 = vunpack.c.l.b16 %v268
  %v349 = vunpack.c.l.b16 %v269
  %v350 = vunpack.c.l.b16 %v270
  %v351 = vunpack.c.l.b16 %v271
  %v352 = vunpack.c.l.b16 %v272
  %v353 = vunpack.c.l.b16 %v273
  %v354 = vunpack.c.l.b16 %v274
  %v355 = vunpack.c.l.b16 %v275
  %v356 = vunpack.c.l.b16 %v276
  %v357 = vunpack.c.l.b16 %v277
  %v358 = vpack.c.b16 %v343, %v342
  %v359 = vpack.c.b16 %v345, %v344
  %v360 = vpack.c.b16 %v347, %v346
  %v361 = vpack.c.b16 %v349, %v348
  %v362 = vpack.c.b16 %v351, %v350
  %v363 = vpack.c.b16 %v353, %v352
  %v364 = vpack.c.b16 %v355, %v354
  %v365 = vpack.c.b16 %v357, %v356
  %374 = vmatpush.bf16.msra.mxu0 %v365
  %375 = vmatpush.bf16.msra.mxu0 %v364
  %376 = vmatpush.bf16.msra.mxu0 %v363
  %377 = vmatpush.bf16.msra.mxu0 %v362
  %378 = vmatpush.bf16.msra.mxu0 %v361
  %379 = vmatpush.bf16.msra.mxu0 %v360
  %380 = vmatpush.bf16.msra.mxu0 %v359
  %381 = vmatpush.bf16.msra.mxu0 %v358
  %382 = vmatmul.bf16.gmra.mxu0 %v310
  %v383 = vpop.f32.mrf.mxu0
  %v384 = vadd.f32 0.0, %v383
  %v385 = vpop.f32.mrf.mxu0
  %v386 = vadd.f32 0.0, %v385
  %387 = vmatmul.bf16.gmra.mxu0 %v311
  %v388 = vpop.f32.mrf.mxu0
  %v389 = vadd.f32 0.0, %v388
  %v390 = vpop.f32.mrf.mxu0
  %v391 = vadd.f32 0.0, %v390
  %392 = vmatmul.bf16.gmra.mxu0 %v312
  %v393 = vpop.f32.mrf.mxu0
  %v394 = vadd.f32 0.0, %v393
  %v395 = vpop.f32.mrf.mxu0
  %v396 = vadd.f32 0.0, %v395
  %397 = vmatmul.bf16.gmra.mxu0 %v313
  %v398 = vpop.f32.mrf.mxu0
  %v399 = vadd.f32 0.0, %v398
  %v400 = vpop.f32.mrf.mxu0
  %v401 = vadd.f32 0.0, %v400
  %402 = vmatmul.bf16.gmra.mxu0 %v314
  %v403 = vpop.f32.mrf.mxu0
  %v404 = vadd.f32 0.0, %v403
  %v405 = vpop.f32.mrf.mxu0
  %v406 = vadd.f32 0.0, %v405
  %407 = vmatmul.bf16.gmra.mxu0 %v315
  %v408 = vpop.f32.mrf.mxu0
  %v409 = vadd.f32 0.0, %v408
  %v410 = vpop.f32.mrf.mxu0
  %v411 = vadd.f32 0.0, %v410
  %412 = vmatmul.bf16.gmra.mxu0 %v316
  %v413 = vpop.f32.mrf.mxu0
  %v414 = vadd.f32 0.0, %v413
  %v415 = vpop.f32.mrf.mxu0
  %v416 = vadd.f32 0.0, %v415
  %417 = vmatmul.bf16.gmra.mxu0 %v317
  %v418 = vpop.f32.mrf.mxu0
  %v419 = vadd.f32 0.0, %v418
  %v420 = vpop.f32.mrf.mxu0
  %v421 = vadd.f32 0.0, %v420
  %422 = vdwg.mxu0
  %v423 = vadd.f32 %v226, %v384
  %v424 = vadd.f32 %v227, %v386
  %v425 = vadd.f32 %v228, %v389
  %v426 = vadd.f32 %v229, %v391
  %v427 = vadd.f32 %v230, %v394
  %v428 = vadd.f32 %v231, %v396
  %v429 = vadd.f32 %v232, %v399
  %v430 = vadd.f32 %v233, %v401
  %v431 = vadd.f32 %v234, %v404
  %v432 = vadd.f32 %v235, %v406
  %v433 = vadd.f32 %v236, %v409
  %v434 = vadd.f32 %v237, %v411
  %v435 = vadd.f32 %v238, %v414
  %v436 = vadd.f32 %v239, %v416
  %v437 = vadd.f32 %v240, %v419
  %v438 = vadd.f32 %v241, %v421
  %439 = vst [vmem:[%s8] sm:$0xff] %v423
  %440 = vst [vmem:[%s8 + $0x8] sm:$0xff] %v424
  %441 = vst [vmem:[%s8 + $0x10] sm:$0xff] %v425
  %442 = vst [vmem:[%s8 + $0x18] sm:$0xff] %v426
  %443 = vst [vmem:[%s8 + $0x20] sm:$0xff] %v427
  %444 = vst [vmem:[%s8 + $0x28] sm:$0xff] %v428
  %445 = vst [vmem:[%s8 + $0x30] sm:$0xff] %v429
  %446 = vst [vmem:[%s8 + $0x38] sm:$0xff] %v430
  %447 = vst [vmem:[%s8 + $0x40] sm:$0xff] %v431
  %448 = vst [vmem:[%s8 + $0x48] sm:$0xff] %v432
  %449 = vst [vmem:[%s8 + $0x50] sm:$0xff] %v433
  %450 = vst [vmem:[%s8 + $0x58] sm:$0xff] %v434
  %451 = vst [vmem:[%s8 + $0x60] sm:$0xff] %v435
  %452 = vst [vmem:[%s8 + $0x68] sm:$0xff] %v436
  %453 = vst [vmem:[%s8 + $0x70] sm:$0xff] %v437
  %454 = vst [vmem:[%s8 + $0x78] sm:$0xff] %v438
  // Predicated region
  $region42: #{fairgnn_all_forward.3} parent=0 // pred_check
    %p455 = pneg %p32
  $region43: #{fairgnn_all_forward.3} parent=0 // pred_check_branch
    %457 = sbr.rel (%p455) target = $region45
  $region44: #{fairgnn_all_forward.3} parent=0 // pred_region
    %v458 = vld [vmem:[%s8] sm:$0xff]
    %v459 = vld [vmem:[%s8 + $0x8] sm:$0xff]
    %v460 = vld [vmem:[%s8 + $0x10] sm:$0xff]
    %v461 = vld [vmem:[%s8 + $0x18] sm:$0xff]
    %v462 = vld [vmem:[%s8 + $0x20] sm:$0xff]
    %v463 = vld [vmem:[%s8 + $0x28] sm:$0xff]
    %v464 = vld [vmem:[%s8 + $0x30] sm:$0xff]
    %v465 = vld [vmem:[%s8 + $0x38] sm:$0xff]
    %v466 = vld [vmem:[%s8 + $0x40] sm:$0xff]
    %v467 = vld [vmem:[%s8 + $0x48] sm:$0xff]
    %v468 = vld [vmem:[%s8 + $0x50] sm:$0xff]
    %v469 = vld [vmem:[%s8 + $0x58] sm:$0xff]
    %v470 = vld [vmem:[%s8 + $0x60] sm:$0xff]
    %v471 = vld [vmem:[%s8 + $0x68] sm:$0xff]
    %v472 = vld [vmem:[%s8 + $0x70] sm:$0xff]
    %v473 = vld [vmem:[%s8 + $0x78] sm:$0xff]
    %v474 = vld [vmem:[%s2] sm:$0x1]
    %v476 = vperm.slane %v474, 0
    %v478 = vadd.f32 %v458, %v476
    %v479 = vadd.f32 %v459, %v476
    %v480 = vadd.f32 %v460, %v476
    %v481 = vadd.f32 %v461, %v476
    %v482 = vadd.f32 %v462, %v476
    %v483 = vadd.f32 %v463, %v476
    %v484 = vadd.f32 %v464, %v476
    %v485 = vadd.f32 %v465, %v476
    %v486 = vadd.f32 %v466, %v476
    %v487 = vadd.f32 %v467, %v476
    %v488 = vadd.f32 %v468, %v476
    %v489 = vadd.f32 %v469, %v476
    %v490 = vadd.f32 %v470, %v476
    %v491 = vadd.f32 %v471, %v476
    %v492 = vadd.f32 %v472, %v476
    %v493 = vadd.f32 %v473, %v476
    %494 = vst [vmem:[%s8] sm:$0xff] %v478
    %495 = vst [vmem:[%s8 + $0x8] sm:$0xff] %v479
    %496 = vst [vmem:[%s8 + $0x10] sm:$0xff] %v480
    %497 = vst [vmem:[%s8 + $0x18] sm:$0xff] %v481
    %498 = vst [vmem:[%s8 + $0x20] sm:$0xff] %v482
    %499 = vst [vmem:[%s8 + $0x28] sm:$0xff] %v483
    %500 = vst [vmem:[%s8 + $0x30] sm:$0xff] %v484
    %501 = vst [vmem:[%s8 + $0x38] sm:$0xff] %v485
    %502 = vst [vmem:[%s8 + $0x40] sm:$0xff] %v486
    %503 = vst [vmem:[%s8 + $0x48] sm:$0xff] %v487
    %504 = vst [vmem:[%s8 + $0x50] sm:$0xff] %v488
    %505 = vst [vmem:[%s8 + $0x58] sm:$0xff] %v489
    %506 = vst [vmem:[%s8 + $0x60] sm:$0xff] %v490
    %507 = vst [vmem:[%s8 + $0x68] sm:$0xff] %v491
    %508 = vst [vmem:[%s8 + $0x70] sm:$0xff] %v492
    %509 = vst [vmem:[%s8 + $0x78] sm:$0xff] %v493
    %v510 = vpack.c.bf16 %v479, %v478
    %v511 = vpack.c.bf16 %v481, %v480
    %v512 = vpack.c.bf16 %v483, %v482
    %v513 = vpack.c.bf16 %v485, %v484
    %v514 = vpack.c.bf16 %v487, %v486
    %v515 = vpack.c.bf16 %v489, %v488
    %v516 = vpack.c.bf16 %v491, %v490
    %v517 = vpack.c.bf16 %v493, %v492
    %v518 = vld [vmem:[%s4] sm:$0xf]
    %v519 = vld [vmem:[%s4 + $0x4] sm:$0xf]
    %v520 = vld [vmem:[%s4 + $0x8] sm:$0xf]
    %v521 = vld [vmem:[%s4 + $0xc] sm:$0xf]
    %v522 = vld [vmem:[%s4 + $0x10] sm:$0xf]
    %v523 = vld [vmem:[%s4 + $0x14] sm:$0xf]
    %v524 = vld [vmem:[%s4 + $0x18] sm:$0xf]
    %v525 = vld [vmem:[%s4 + $0x1c] sm:$0xf]
    %v526 = vld [vmem:[%s4 + $0x20] sm:$0xf]
    %v527 = vld [vmem:[%s4 + $0x24] sm:$0xf]
    %v528 = vld [vmem:[%s4 + $0x28] sm:$0xf]
    %v529 = vld [vmem:[%s4 + $0x2c] sm:$0xf]
    %v530 = vld [vmem:[%s4 + $0x30] sm:$0xf]
    %v531 = vld [vmem:[%s4 + $0x34] sm:$0xf]
    %v532 = vld [vmem:[%s4 + $0x38] sm:$0xf]
    %v533 = vld [vmem:[%s4 + $0x3c] sm:$0xf]
    %v534 = vld [vmem:[%s5] sm:$0x1]
    %v536 = vperm.slane %v534, 0
    %v554 = vunpack.c.l.b16 %v518
    %v555 = vunpack.c.l.b16 %v519
    %v556 = vunpack.c.l.b16 %v520
    %v557 = vunpack.c.l.b16 %v521
    %v558 = vunpack.c.l.b16 %v522
    %v559 = vunpack.c.l.b16 %v523
    %v560 = vunpack.c.l.b16 %v524
    %v561 = vunpack.c.l.b16 %v525
    %v562 = vunpack.c.l.b16 %v526
    %v563 = vunpack.c.l.b16 %v527
    %v564 = vunpack.c.l.b16 %v528
    %v565 = vunpack.c.l.b16 %v529
    %v566 = vunpack.c.l.b16 %v530
    %v567 = vunpack.c.l.b16 %v531
    %v568 = vunpack.c.l.b16 %v532
    %v569 = vunpack.c.l.b16 %v533
    %v570 = vpack.c.b16 %v555, %v554
    %v571 = vpack.c.b16 %v557, %v556
    %v572 = vpack.c.b16 %v559, %v558
    %v573 = vpack.c.b16 %v561, %v560
    %v574 = vpack.c.b16 %v563, %v562
    %v575 = vpack.c.b16 %v565, %v564
    %v576 = vpack.c.b16 %v567, %v566
    %v577 = vpack.c.b16 %v569, %v568
    %586 = vmatpush.bf16.msra.mxu0 %v577
    %587 = vmatpush.bf16.msra.mxu0 %v576
    %588 = vmatpush.bf16.msra.mxu0 %v575
    %589 = vmatpush.bf16.msra.mxu0 %v574
    %590 = vmatpush.bf16.msra.mxu0 %v573
    %591 = vmatpush.bf16.msra.mxu0 %v572
    %592 = vmatpush.bf16.msra.mxu0 %v571
    %593 = vmatpush.bf16.msra.mxu0 %v570
    %594 = vmatmul.bf16.gmra.mxu0 %v510
    %v595 = vpop.f32.mrf.mxu0
    %v596 = vadd.f32 %v536, %v595
    %v597 = vpop.f32.mrf.mxu0
    %v598 = vadd.f32 %v536, %v597
    %599 = vmatmul.bf16.gmra.mxu0 %v511
    %v600 = vpop.f32.mrf.mxu0
    %v601 = vadd.f32 %v536, %v600
    %v602 = vpop.f32.mrf.mxu0
    %v603 = vadd.f32 %v536, %v602
    %604 = vmatmul.bf16.gmra.mxu0 %v512
    %v605 = vpop.f32.mrf.mxu0
    %v606 = vadd.f32 %v536, %v605
    %v607 = vpop.f32.mrf.mxu0
    %v608 = vadd.f32 %v536, %v607
    %609 = vmatmul.bf16.gmra.mxu0 %v513
    %v610 = vpop.f32.mrf.mxu0
    %v611 = vadd.f32 %v536, %v610
    %v612 = vpop.f32.mrf.mxu0
    %v613 = vadd.f32 %v536, %v612
    %614 = vmatmul.bf16.gmra.mxu0 %v514
    %v615 = vpop.f32.mrf.mxu0
    %v616 = vadd.f32 %v536, %v615
    %v617 = vpop.f32.mrf.mxu0
    %v618 = vadd.f32 %v536, %v617
    %619 = vmatmul.bf16.gmra.mxu0 %v515
    %v620 = vpop.f32.mrf.mxu0
    %v621 = vadd.f32 %v536, %v620
    %v622 = vpop.f32.mrf.mxu0
    %v623 = vadd.f32 %v536, %v622
    %624 = vmatmul.bf16.gmra.mxu0 %v516
    %v625 = vpop.f32.mrf.mxu0
    %v626 = vadd.f32 %v536, %v625
    %v627 = vpop.f32.mrf.mxu0
    %v628 = vadd.f32 %v536, %v627
    %629 = vmatmul.bf16.gmra.mxu0 %v517
    %v630 = vpop.f32.mrf.mxu0
    %v631 = vadd.f32 %v536, %v630
    %v632 = vpop.f32.mrf.mxu0
    %v633 = vadd.f32 %v536, %v632
    %634 = vdwg.mxu0
    %v635 = vmax.f32 %v596, 0.0
    %v636 = vmax.f32 %v598, 0.0
    %v637 = vmax.f32 %v601, 0.0
    %v638 = vmax.f32 %v603, 0.0
    %v639 = vmax.f32 %v606, 0.0
    %v640 = vmax.f32 %v608, 0.0
    %v641 = vmax.f32 %v611, 0.0
    %v642 = vmax.f32 %v613, 0.0
    %v643 = vmax.f32 %v616, 0.0
    %v644 = vmax.f32 %v618, 0.0
    %v645 = vmax.f32 %v621, 0.0
    %v646 = vmax.f32 %v623, 0.0
    %v647 = vmax.f32 %v626, 0.0
    %v648 = vmax.f32 %v628, 0.0
    %v649 = vmax.f32 %v631, 0.0
    %v650 = vmax.f32 %v633, 0.0
    %v651 = vpack.c.bf16 %v636, %v635
    %v652 = vpack.c.bf16 %v638, %v637
    %v653 = vpack.c.bf16 %v640, %v639
    %v654 = vpack.c.bf16 %v642, %v641
    %v655 = vpack.c.bf16 %v644, %v643
    %v656 = vpack.c.bf16 %v646, %v645
    %v657 = vpack.c.bf16 %v648, %v647
    %v658 = vpack.c.bf16 %v650, %v649
    %v659 = vld [vmem:[%s6] sm:$0xf]
    %v660 = vld [vmem:[%s6 + $0x4] sm:$0xf]
    %v661 = vld [vmem:[%s6 + $0x8] sm:$0xf]
    %v662 = vld [vmem:[%s6 + $0xc] sm:$0xf]
    %v663 = vld [vmem:[%s6 + $0x10] sm:$0xf]
    %v664 = vld [vmem:[%s6 + $0x14] sm:$0xf]
    %v665 = vld [vmem:[%s6 + $0x18] sm:$0xf]
    %v666 = vld [vmem:[%s6 + $0x1c] sm:$0xf]
    %v667 = vld [vmem:[%s6 + $0x20] sm:$0xf]
    %v668 = vld [vmem:[%s6 + $0x24] sm:$0xf]
    %v669 = vld [vmem:[%s6 + $0x28] sm:$0xf]
    %v670 = vld [vmem:[%s6 + $0x2c] sm:$0xf]
    %v671 = vld [vmem:[%s6 + $0x30] sm:$0xf]
    %v672 = vld [vmem:[%s6 + $0x34] sm:$0xf]
    %v673 = vld [vmem:[%s6 + $0x38] sm:$0xf]
    %v674 = vld [vmem:[%s6 + $0x3c] sm:$0xf]
    %v675 = vld [vmem:[%s7] sm:$0x1]
    %v677 = vperm.slane %v675, 0
    %v695 = vunpack.c.l.b16 %v659
    %v696 = vunpack.c.l.b16 %v660
    %v697 = vunpack.c.l.b16 %v661
    %v698 = vunpack.c.l.b16 %v662
    %v699 = vunpack.c.l.b16 %v663
    %v700 = vunpack.c.l.b16 %v664
    %v701 = vunpack.c.l.b16 %v665
    %v702 = vunpack.c.l.b16 %v666
    %v703 = vunpack.c.l.b16 %v667
    %v704 = vunpack.c.l.b16 %v668
    %v705 = vunpack.c.l.b16 %v669
    %v706 = vunpack.c.l.b16 %v670
    %v707 = vunpack.c.l.b16 %v671
    %v708 = vunpack.c.l.b16 %v672
    %v709 = vunpack.c.l.b16 %v673
    %v710 = vunpack.c.l.b16 %v674
    %v711 = vpack.c.b16 %v696, %v695
    %v712 = vpack.c.b16 %v698, %v697
    %v713 = vpack.c.b16 %v700, %v699
    %v714 = vpack.c.b16 %v702, %v701
    %v715 = vpack.c.b16 %v704, %v703
    %v716 = vpack.c.b16 %v706, %v705
    %v717 = vpack.c.b16 %v708, %v707
    %v718 = vpack.c.b16 %v710, %v709
    %727 = vmatpush.bf16.msra.mxu0 %v718
    %728 = vmatpush.bf16.msra.mxu0 %v717
    %729 = vmatpush.bf16.msra.mxu0 %v716
    %730 = vmatpush.bf16.msra.mxu0 %v715
    %731 = vmatpush.bf16.msra.mxu0 %v714
    %732 = vmatpush.bf16.msra.mxu0 %v713
    %733 = vmatpush.bf16.msra.mxu0 %v712
    %734 = vmatpush.bf16.msra.mxu0 %v711
    %735 = vmatmul.bf16.gmra.mxu0 %v651
    %v736 = vpop.f32.mrf.mxu0
    %v737 = vadd.f32 %v677, %v736
    %v738 = vpop.f32.mrf.mxu0
    %v739 = vadd.f32 %v677, %v738
    %740 = vmatmul.bf16.gmra.mxu0 %v652
    %v741 = vpop.f32.mrf.mxu0
    %v742 = vadd.f32 %v677, %v741
    %v743 = vpop.f32.mrf.mxu0
    %v744 = vadd.f32 %v677, %v743
    %745 = vmatmul.bf16.gmra.mxu0 %v653
    %v746 = vpop.f32.mrf.mxu0
    %v747 = vadd.f32 %v677, %v746
    %v748 = vpop.f32.mrf.mxu0
    %v749 = vadd.f32 %v677, %v748
    %750 = vmatmul.bf16.gmra.mxu0 %v654
    %v751 = vpop.f32.mrf.mxu0
    %v752 = vadd.f32 %v677, %v751
    %v753 = vpop.f32.mrf.mxu0
    %v754 = vadd.f32 %v677, %v753
    %755 = vmatmul.bf16.gmra.mxu0 %v655
    %v756 = vpop.f32.mrf.mxu0
    %v757 = vadd.f32 %v677, %v756
    %v758 = vpop.f32.mrf.mxu0
    %v759 = vadd.f32 %v677, %v758
    %760 = vmatmul.bf16.gmra.mxu0 %v656
    %v761 = vpop.f32.mrf.mxu0
    %v762 = vadd.f32 %v677, %v761
    %v763 = vpop.f32.mrf.mxu0
    %v764 = vadd.f32 %v677, %v763
    %765 = vmatmul.bf16.gmra.mxu0 %v657
    %v766 = vpop.f32.mrf.mxu0
    %v767 = vadd.f32 %v677, %v766
    %v768 = vpop.f32.mrf.mxu0
    %v769 = vadd.f32 %v677, %v768
    %770 = vmatmul.bf16.gmra.mxu0 %v658
    %v771 = vpop.f32.mrf.mxu0
    %v772 = vadd.f32 %v677, %v771
    %v773 = vpop.f32.mrf.mxu0
    %v774 = vadd.f32 %v677, %v773
    %775 = vdwg.mxu0
    %776 = vst [vmem:[%s9] sm:$0xff] %v737
    %777 = vst [vmem:[%s9 + $0x8] sm:$0xff] %v739
    %778 = vst [vmem:[%s9 + $0x10] sm:$0xff] %v742
    %779 = vst [vmem:[%s9 + $0x18] sm:$0xff] %v744
    %780 = vst [vmem:[%s9 + $0x20] sm:$0xff] %v747
    %781 = vst [vmem:[%s9 + $0x28] sm:$0xff] %v749
    %782 = vst [vmem:[%s9 + $0x30] sm:$0xff] %v752
    %783 = vst [vmem:[%s9 + $0x38] sm:$0xff] %v754
    %784 = vst [vmem:[%s9 + $0x40] sm:$0xff] %v757
    %785 = vst [vmem:[%s9 + $0x48] sm:$0xff] %v759
    %786 = vst [vmem:[%s9 + $0x50] sm:$0xff] %v762
    %787 = vst [vmem:[%s9 + $0x58] sm:$0xff] %v764
    %788 = vst [vmem:[%s9 + $0x60] sm:$0xff] %v767
    %789 = vst [vmem:[%s9 + $0x68] sm:$0xff] %v769
    %790 = vst [vmem:[%s9 + $0x70] sm:$0xff] %v772
    %791 = vst [vmem:[%s9 + $0x78] sm:$0xff] %v774
  $region45: #{fairgnn_all_forward.3} parent=0 // pred_fallthru
    _
  // Predicated region
  $region46: #{fairgnn_all_forward.3} parent=0 // pred_check
    _
  $region47: #{fairgnn_all_forward.3} parent=0 // pred_check_branch
    %793 = sbr.rel (0) target = $region49
  $region48: #{fairgnn_all_forward.3} parent=0 // pred_region
    _
  $region49: #{fairgnn_all_forward.3} parent=0 // pred_fallthru
    _
  // Predicated region
  $region50: #{fairgnn_all_forward.3} parent=0 // pred_check
    _
  $region51: #{fairgnn_all_forward.3} parent=0 // pred_check_branch
    %795 = sbr.rel (0) target = $region53
  $region52: #{fairgnn_all_forward.3} parent=0 // pred_region
    _
  $region53: #{fairgnn_all_forward.3} parent=0 // pred_fallthru
    _
  // Predicated region
  $region54: #{fairgnn_all_forward.3} parent=0 // pred_check
    _
  $region55: #{fairgnn_all_forward.3} parent=0 // pred_check_branch
    %797 = sbr.rel (0) target = $region57
  $region56: #{fairgnn_all_forward.3} parent=0 // pred_region
    _
  $region57: #{fairgnn_all_forward.3} parent=0 // pred_fallthru
    _
  // Predicated region
  $region58: #{fairgnn_all_forward.3} parent=0 // pred_check
    _
  $region59: #{fairgnn_all_forward.3} parent=0 // pred_check_branch
    %799 = sbr.rel (0) target = $region61
  $region60: #{fairgnn_all_forward.3} parent=0 // pred_region
    _
  $region61: #{fairgnn_all_forward.3} parent=0 // pred_fallthru
    _

</llo_original>
